<compile_context>
chip_gen: v7x
topology: tpu7x:2x2x1
jax: 0.10.0
libtpu: 0.0.40
codegen_flags: <defaults>
</compile_context>

<pallas_src>
import jax
import jax.numpy as jnp
from jax.experimental import pallas as pl
from jax.experimental.pallas import tpu as pltpu

LANE = 128


def _round_up(n, m):
    return ((n + m - 1) // m) * m


def chess_policy_kernel(x_ref, w1_ref, b1_ref, w2_ref, b2_ref, w3_ref, b3_ref,
                        o_ref, h_ref, logit_ref, m_ref, d_ref):
    """Grid = (batch tiles, fc3 column tiles); axis 1 sweeps W3 columns."""
    j = pl.program_id(1)
    n_col_tiles = pl.num_programs(1)
    tn = w3_ref.shape[1]           # static column-tile width
    n_parts = logit_ref.shape[0]   # static number of column tiles

    # ---- fc1 + relu, fc2 + relu: once per batch tile (first column step) ----
    @pl.when(j == 0)
    def _():
        x = x_ref[...].astype(jnp.bfloat16)
        h = jnp.dot(x, w1_ref[...], preferred_element_type=jnp.float32)
        h = jnp.maximum(h + b1_ref[...], 0.0)
        h = jnp.dot(h.astype(jnp.bfloat16), w2_ref[...],
                    preferred_element_type=jnp.float32)
        h_ref[...] = jnp.maximum(h + b2_ref[...], 0.0).astype(h_ref.dtype)
        # Online-softmax state.
        m_ref[...] = jnp.full_like(m_ref, -jnp.inf)
        d_ref[...] = jnp.zeros_like(d_ref)

    # ---- fc3 for this column tile (next W3 tile streams in meanwhile) ----
    logits = (jnp.dot(h_ref[...], w3_ref[...],
                      preferred_element_type=jnp.float32) + b3_ref[...])
    logit_ref[j] = logits

    # ---- online softmax statistics (overlaps with W3 DMA of tile j+1) ----
    m_prev = m_ref[...]
    m_new = jnp.maximum(m_prev, jnp.max(logits, axis=-1, keepdims=True))
    d_ref[...] = (d_ref[...] * jnp.exp(m_prev - m_new) +
                  jnp.sum(jnp.exp(logits - m_new), axis=-1, keepdims=True))
    m_ref[...] = m_new

    # ---- finalize: normalize + lane-dense output stores on last column tile ----
    @pl.when(j == n_col_tiles - 1)
    def _():
        m = m_ref[...]
        inv = pl.reciprocal(d_ref[...], approx=False)   # exact division
        for k in range(n_parts):                         # static lane slices
            o_ref[:, k * tn:(k + 1) * tn] = (
                jnp.exp(logit_ref[k] - m) * inv).astype(o_ref.dtype)


def chess_policy_forward(x, w1, b1, w2, b2, w3, b3, *,
                         batch_tile=None, col_tile=1280):
    B, F = x.shape
    H = w1.shape[1]
    O = w3.shape[1]

    # Lane-pad feature / output dims; pad batch to the batch tile.
    F_p = _round_up(F, LANE)
    tn = _round_up(min(col_tile, _round_up(O, LANE)), LANE)
    O_p = _round_up(O, tn)
    n_col = O_p // tn

    if batch_tile is None:
        batch_tile = min(_round_up(B, 8), 256)
    bt = _round_up(batch_tile, 8)
    B_p = _round_up(B, bt)

    f32, bf16 = jnp.float32, jnp.bfloat16
    x_p = jnp.zeros((B_p, F_p), f32).at[:B, :F].set(x.astype(f32))
    w1_p = jnp.zeros((F_p, H), bf16).at[:F, :].set(w1.astype(bf16))
    w2_p = w2.astype(bf16)
    w3_p = jnp.zeros((H, O_p), bf16).at[:, :O].set(w3.astype(bf16))
    b1_p = b1.reshape(1, H).astype(f32)
    b2_p = b2.reshape(1, H).astype(f32)
    # Padded logit columns get a huge negative bias so exp() drives them to 0.
    b3_p = jnp.full((1, O_p), -1e30, f32).at[:, :O].set(
        b3.reshape(1, O).astype(f32))

    grid = (B_p // bt, n_col)

    # Advisory cost hint: kernel is HBM-bandwidth bound.
    flops = 2 * B_p * (F_p * H + H * H + H * O_p)
    bytes_accessed = (x_p.size * 4 + (w1_p.size + w2_p.size + w3_p.size) * 2 +
                      (b1_p.size + b2_p.size + b3_p.size) * 4 + B_p * O_p * 4)
    cost = pl.CostEstimate(flops=flops, transcendentals=2 * B_p * O_p,
                           bytes_accessed=bytes_accessed)

    out = pl.pallas_call(
        chess_policy_kernel,
        out_shape=jax.ShapeDtypeStruct((B_p, O_p), jnp.float32),
        grid_spec=pltpu.PrefetchScalarGridSpec(
            num_scalar_prefetch=0,
            grid=grid,
            in_specs=[
                pl.BlockSpec((bt, F_p), lambda i, j: (i, 0)),   # x (batch tiled)
                pl.BlockSpec((F_p, H), lambda i, j: (0, 0)),    # W1 (resident)
                pl.BlockSpec((1, H), lambda i, j: (0, 0)),      # b1
                pl.BlockSpec((H, H), lambda i, j: (0, 0)),      # W2 (resident)
                pl.BlockSpec((1, H), lambda i, j: (0, 0)),      # b2
                pl.BlockSpec((H, tn), lambda i, j: (0, j)),     # W3 (column-streamed)
                pl.BlockSpec((1, tn), lambda i, j: (0, j)),     # b3 (column-streamed)
            ],
            out_specs=pl.BlockSpec((bt, O_p), lambda i, j: (i, 0)),
            scratch_shapes=[
                pltpu.VMEM((bt, H), jnp.bfloat16),          # hidden activations
                pltpu.VMEM((n_col, bt, tn), jnp.float32),   # logit column tiles
                pltpu.VMEM((bt, 1), jnp.float32),           # running row max
                pltpu.VMEM((bt, 1), jnp.float32),           # running denominator
            ],
        ),
        compiler_params=pltpu.CompilerParams(
            dimension_semantics=("parallel", "arbitrary"),
            vmem_limit_bytes=32 << 20,   # ample for bt<=256, safe on v7x's 64 MiB
        ),
        cost_estimate=cost,
    )(x_p, w1_p, b1_p, w2_p, b2_p, w3_p, b3_p)

    return out[:B, :O]


def init_params(key, input_size=773, hidden_size=256, output_size=4672):
    """Deterministic synthetic init matching nn.Linear shapes (stored transposed)."""
    k1, k2, k3, k4, k5, k6 = jax.random.split(key, 6)

    def lin(kw, kb, fan_in, fan_out):
        bound = 1.0 / jnp.sqrt(fan_in)
        w = jax.random.uniform(kw, (fan_in, fan_out), jnp.float32, -bound, bound)
        b = jax.random.uniform(kb, (1, fan_out), jnp.float32, -bound, bound)
        return w, b

    w1, b1 = lin(k1, k2, input_size, hidden_size)
    w2, b2 = lin(k3, k4, hidden_size, hidden_size)
    w3, b3 = lin(k5, k6, hidden_size, output_size)
    return w1, b1, w2, b2, w3, b3


def reference_forward(x, w1, b1, w2, b2, w3, b3):
    """Pure-JAX reference using the same bf16-weight / f32-accumulate numerics."""
    def bdot(a, w):
        return jax.lax.dot(a.astype(jnp.bfloat16), w.astype(jnp.bfloat16),
                           preferred_element_type=jnp.float32)
    h = jnp.maximum(bdot(x, w1) + b1, 0.0)
    h = jnp.maximum(bdot(h, w2) + b2, 0.0)
    logits = bdot(h, w3) + b3
    return jax.nn.softmax(logits, axis=1)


if __name__ == "__main__":
    # Module-consistent shapes: batch=8, input=773, hidden=256, out=4672.
    INPUT, HIDDEN, OUTPUT = 773, 256, 4672
    B = 8

    key = jax.random.PRNGKey(0)
    kx, kp = jax.random.split(key)
    x = jax.random.uniform(kx, (B, INPUT), jnp.float32)  # chess bitboard-ish features
    params = init_params(kp, INPUT, HIDDEN, OUTPUT)

    out = chess_policy_forward(x, *params)
    out = jax.block_until_ready(out)

    ref = reference_forward(x, *params)
    assert out.shape == (B, OUTPUT)
    assert jnp.allclose(jnp.sum(out, axis=1), 1.0, atol=1e-4)
    assert jnp.allclose(out, ref, atol=1e-4, rtol=2e-2), \
        float(jnp.max(jnp.abs(out - ref)))

    print("KERNEL_OK")
</pallas_src>

<mosaic_0001>
module attributes {stable_mosaic.version = 11 : i64} {
  func.func @chess_policy_kernel(%arg0: i32, %arg1: i32, %arg2: memref<8x896xf32, #tpu.memory_space<vmem>>, %arg3: memref<896x256xbf16, #tpu.memory_space<vmem>>, %arg4: memref<1x256xf32, #tpu.memory_space<vmem>>, %arg5: memref<256x256xbf16, #tpu.memory_space<vmem>>, %arg6: memref<1x256xf32, #tpu.memory_space<vmem>>, %arg7: memref<256x1280xbf16, #tpu.memory_space<vmem>>, %arg8: memref<1x1280xf32, #tpu.memory_space<vmem>>, %arg9: memref<8x5120xf32, #tpu.memory_space<vmem>>, %arg10: memref<8x256xbf16, #tpu.memory_space<vmem>>, %arg11: memref<4x8x1280xf32, #tpu.memory_space<vmem>>, %arg12: memref<8x1xf32, #tpu.memory_space<vmem>>, %arg13: memref<8x1xf32, #tpu.memory_space<vmem>>) attributes {dimension_semantics = [#tpu.dimension_semantics<parallel>, #tpu.dimension_semantics<arbitrary>], iteration_bounds = array<i64: 1, 4>, scalar_prefetch = 0 : i64, scratch_operands = 4 : i64, tpu.core_type = #tpu.core_type<tc>, window_params = [{transform_indices = @transform_0, window_bounds = array<i64: 8, 896>}, {pipeline_mode = #tpu.pipeline_mode<synchronous>, transform_indices = @transform_1, window_bounds = array<i64: 896, 256>}, {pipeline_mode = #tpu.pipeline_mode<synchronous>, transform_indices = @transform_2, window_bounds = array<i64: 1, 256>}, {pipeline_mode = #tpu.pipeline_mode<synchronous>, transform_indices = @transform_3, window_bounds = array<i64: 256, 256>}, {pipeline_mode = #tpu.pipeline_mode<synchronous>, transform_indices = @transform_4, window_bounds = array<i64: 1, 256>}, {transform_indices = @transform_5, window_bounds = array<i64: 256, 1280>}, {transform_indices = @transform_6, window_bounds = array<i64: 1, 1280>}, {transform_indices = @transform_7, window_bounds = array<i64: 8, 5120>}]} {
    %c0_i32 = arith.constant 0 : i32
    %0 = arith.cmpi eq, %arg1, %c0_i32 : i32
    %1 = arith.extui %0 : i1 to i32
    %c0_i32_0 = arith.constant 0 : i32
    %2 = arith.cmpi ne, %1, %c0_i32_0 : i32
    scf.if %2 {
      %c0_19 = arith.constant 0 : index
      %c0_20 = arith.constant 0 : index
      %32 = vector.load %arg2[%c0_19, %c0_20] : memref<8x896xf32, #tpu.memory_space<vmem>>, vector<8x896xf32>
      %33 = arith.truncf %32 : vector<8x896xf32> to vector<8x896xbf16>
      %c0_21 = arith.constant 0 : index
      %c0_22 = arith.constant 0 : index
      %34 = vector.load %arg3[%c0_21, %c0_22] : memref<896x256xbf16, #tpu.memory_space<vmem>>, vector<896x256xbf16>
      %cst_23 = arith.constant dense<0.000000e+00> : vector<8x256xf32>
      %35 = tpu.matmul %33, %34, %cst_23 {dimension_numbers = #tpu.dot_dimension_numbers<[1], [0], [0], [1], [0, 0, 1, 1], [], []>} : vector<8x896xbf16>, vector<896x256xbf16>, vector<8x256xf32> -> vector<8x256xf32>
      %c0_24 = arith.constant 0 : index
      %c0_25 = arith.constant 0 : index
      %36 = vector.load %arg4[%c0_24, %c0_25] : memref<1x256xf32, #tpu.memory_space<vmem>>, vector<1x256xf32>
      %37 = vector.broadcast %36 : vector<1x256xf32> to vector<8x256xf32>
      %38 = arith.addf %35, %37 : vector<8x256xf32>
      %cst_26 = arith.constant 0.000000e+00 : f32
      %39 = vector.broadcast %cst_26 : f32 to vector<8x256xf32>
      %40 = arith.maximumf %38, %39 : vector<8x256xf32>
      %41 = arith.truncf %40 : vector<8x256xf32> to vector<8x256xbf16>
      %c0_27 = arith.constant 0 : index
      %c0_28 = arith.constant 0 : index
      %42 = vector.load %arg5[%c0_27, %c0_28] : memref<256x256xbf16, #tpu.memory_space<vmem>>, vector<256x256xbf16>
      %cst_29 = arith.constant dense<0.000000e+00> : vector<8x256xf32>
      %43 = tpu.matmul %41, %42, %cst_29 {dimension_numbers = #tpu.dot_dimension_numbers<[1], [0], [0], [1], [0, 0, 1, 1], [], []>} : vector<8x256xbf16>, vector<256x256xbf16>, vector<8x256xf32> -> vector<8x256xf32>
      %c0_30 = arith.constant 0 : index
      %c0_31 = arith.constant 0 : index
      %44 = vector.load %arg6[%c0_30, %c0_31] : memref<1x256xf32, #tpu.memory_space<vmem>>, vector<1x256xf32>
      %45 = vector.broadcast %44 : vector<1x256xf32> to vector<8x256xf32>
      %46 = arith.addf %43, %45 : vector<8x256xf32>
      %cst_32 = arith.constant 0.000000e+00 : f32
      %47 = vector.broadcast %cst_32 : f32 to vector<8x256xf32>
      %48 = arith.maximumf %46, %47 : vector<8x256xf32>
      %49 = arith.truncf %48 : vector<8x256xf32> to vector<8x256xbf16>
      %c0_33 = arith.constant 0 : index
      %c0_34 = arith.constant 0 : index
      %50 = vector.load %arg10[%c0_33, %c0_34] : memref<8x256xbf16, #tpu.memory_space<vmem>>, vector<8x256xbf16>
      tpu.vector_store %arg10[%c0_33, %c0_34], %49 {strides = array<i32>} : memref<8x256xbf16, #tpu.memory_space<vmem>>, vector<8x256xbf16>,
      %cst_35 = arith.constant 0xFF800000 : f32
      %51 = vector.broadcast %cst_35 : f32 to vector<8x1xf32>
      %c0_36 = arith.constant 0 : index
      %c0_37 = arith.constant 0 : index
      %52 = vector.load %arg12[%c0_36, %c0_37] : memref<8x1xf32, #tpu.memory_space<vmem>>, vector<8x1xf32>
      tpu.vector_store %arg12[%c0_36, %c0_37], %51 {strides = array<i32>} : memref<8x1xf32, #tpu.memory_space<vmem>>, vector<8x1xf32>,
      %cst_38 = arith.constant 0.000000e+00 : f32
      %53 = vector.broadcast %cst_38 : f32 to vector<8x1xf32>
      %c0_39 = arith.constant 0 : index
      %c0_40 = arith.constant 0 : index
      %54 = vector.load %arg13[%c0_39, %c0_40] : memref<8x1xf32, #tpu.memory_space<vmem>>, vector<8x1xf32>
      tpu.vector_store %arg13[%c0_39, %c0_40], %53 {strides = array<i32>} : memref<8x1xf32, #tpu.memory_space<vmem>>, vector<8x1xf32>,
    } else {
    }
    %c0 = arith.constant 0 : index
    %c0_1 = arith.constant 0 : index
    %3 = vector.load %arg10[%c0, %c0_1] : memref<8x256xbf16, #tpu.memory_space<vmem>>, vector<8x256xbf16>
    %c0_2 = arith.constant 0 : index
    %c0_3 = arith.constant 0 : index
    %4 = vector.load %arg7[%c0_2, %c0_3] : memref<256x1280xbf16, #tpu.memory_space<vmem>>, vector<256x1280xbf16>
    %cst = arith.constant dense<0.000000e+00> : vector<8x1280xf32>
    %5 = tpu.matmul %3, %4, %cst {dimension_numbers = #tpu.dot_dimension_numbers<[1], [0], [0], [1], [0, 0, 1, 1], [], []>} : vector<8x256xbf16>, vector<256x1280xbf16>, vector<8x1280xf32> -> vector<8x1280xf32>
    %c0_4 = arith.constant 0 : index
    %c0_5 = arith.constant 0 : index
    %6 = vector.load %arg8[%c0_4, %c0_5] : memref<1x1280xf32, #tpu.memory_space<vmem>>, vector<1x1280xf32>
    %7 = vector.broadcast %6 : vector<1x1280xf32> to vector<8x1280xf32>
    %8 = arith.addf %5, %7 : vector<8x1280xf32>
    %9 = arith.index_cast %arg1 : i32 to index
    %c0_6 = arith.constant 0 : index
    %c0_7 = arith.constant 0 : index
    %10 = vector.load %arg11[%9, %c0_6, %c0_7] : memref<4x8x1280xf32, #tpu.memory_space<vmem>>, vector<1x8x1280xf32>
    %11 = vector.shape_cast %10 : vector<1x8x1280xf32> to vector<8x1280xf32>
    %12 = vector.shape_cast %8 : vector<8x1280xf32> to vector<1x8x1280xf32>
    tpu.vector_store %arg11[%9, %c0_6, %c0_7], %12 {strides = array<i32>} : memref<4x8x1280xf32, #tpu.memory_space<vmem>>, vector<1x8x1280xf32>,
    %c0_8 = arith.constant 0 : index
    %c0_9 = arith.constant 0 : index
    %13 = vector.load %arg12[%c0_8, %c0_9] : memref<8x1xf32, #tpu.memory_space<vmem>>, vector<8x1xf32>
    %cst_10 = arith.constant dense<0xFF800000> : vector<8xf32>
    %14 = vector.multi_reduction <maximumf>, %8, %cst_10 [1] : vector<8x1280xf32> to vector<8xf32>
    %15 = vector.shape_cast %14 : vector<8xf32> to vector<8x1xf32>
    %16 = arith.maximumf %13, %15 : vector<8x1xf32>
    %c0_11 = arith.constant 0 : index
    %c0_12 = arith.constant 0 : index
    %17 = vector.load %arg13[%c0_11, %c0_12] : memref<8x1xf32, #tpu.memory_space<vmem>>, vector<8x1xf32>
    %18 = arith.subf %13, %16 : vector<8x1xf32>
    %19 = math.exp %18 : vector<8x1xf32>
    %20 = arith.mulf %17, %19 : vector<8x1xf32>
    %21 = vector.broadcast %16 : vector<8x1xf32> to vector<8x1280xf32>
    %22 = arith.subf %8, %21 : vector<8x1280xf32>
    %23 = math.exp %22 : vector<8x1280xf32>
    %cst_13 = arith.constant dense<0.000000e+00> : vector<8xf32>
    %24 = vector.multi_reduction <add>, %23, %cst_13 [1] : vector<8x1280xf32> to vector<8xf32>
    %25 = vector.shape_cast %24 : vector<8xf32> to vector<8x1xf32>
    %26 = arith.addf %20, %25 : vector<8x1xf32>
    %c0_14 = arith.constant 0 : index
    %c0_15 = arith.constant 0 : index
    %27 = vector.load %arg13[%c0_14, %c0_15] : memref<8x1xf32, #tpu.memory_space<vmem>>, vector<8x1xf32>
    tpu.vector_store %arg13[%c0_14, %c0_15], %26 {strides = array<i32>} : memref<8x1xf32, #tpu.memory_space<vmem>>, vector<8x1xf32>,
    %c0_16 = arith.constant 0 : index
    %c0_17 = arith.constant 0 : index
    %28 = vector.load %arg12[%c0_16, %c0_17] : memref<8x1xf32, #tpu.memory_space<vmem>>, vector<8x1xf32>
    tpu.vector_store %arg12[%c0_16, %c0_17], %16 {strides = array<i32>} : memref<8x1xf32, #tpu.memory_space<vmem>>, vector<8x1xf32>,
    %c3_i32 = arith.constant 3 : i32
    %29 = arith.cmpi eq, %arg1, %c3_i32 : i32
    %30 = arith.extui %29 : i1 to i32
    %c0_i32_18 = arith.constant 0 : i32
    %31 = arith.cmpi ne, %30, %c0_i32_18 : i32
    scf.if %31 {
      %c0_19 = arith.constant 0 : index
      %c0_20 = arith.constant 0 : index
      %32 = vector.load %arg12[%c0_19, %c0_20] : memref<8x1xf32, #tpu.memory_space<vmem>>, vector<8x1xf32>
      %c0_21 = arith.constant 0 : index
      %c0_22 = arith.constant 0 : index
      %33 = vector.load %arg13[%c0_21, %c0_22] : memref<8x1xf32, #tpu.memory_space<vmem>>, vector<8x1xf32>
      %34 = tpu.reciprocal %33 : vector<8x1xf32> -> vector<8x1xf32>
      %c0_23 = arith.constant 0 : index
      %c0_24 = arith.constant 0 : index
      %c0_25 = arith.constant 0 : index
      %35 = vector.load %arg11[%c0_23, %c0_24, %c0_25] : memref<4x8x1280xf32, #tpu.memory_space<vmem>>, vector<1x8x1280xf32>
      %36 = vector.shape_cast %35 : vector<1x8x1280xf32> to vector<8x1280xf32>
      %37 = vector.broadcast %32 : vector<8x1xf32> to vector<8x1280xf32>
      %38 = arith.subf %36, %37 : vector<8x1280xf32>
      %39 = math.exp %38 : vector<8x1280xf32>
      %40 = vector.broadcast %34 : vector<8x1xf32> to vector<8x1280xf32>
      %41 = arith.mulf %39, %40 : vector<8x1280xf32>
      %c0_26 = arith.constant 0 : index
      %c0_27 = arith.constant 0 : index
      %42 = vector.load %arg9[%c0_26, %c0_27] : memref<8x5120xf32, #tpu.memory_space<vmem>>, vector<8x1280xf32>
      tpu.vector_store %arg9[%c0_26, %c0_27], %41 {strides = array<i32>} : memref<8x5120xf32, #tpu.memory_space<vmem>>, vector<8x1280xf32>,
      %c1 = arith.constant 1 : index
      %c0_28 = arith.constant 0 : index
      %c0_29 = arith.constant 0 : index
      %43 = vector.load %arg11[%c1, %c0_28, %c0_29] : memref<4x8x1280xf32, #tpu.memory_space<vmem>>, vector<1x8x1280xf32>
      %44 = vector.shape_cast %43 : vector<1x8x1280xf32> to vector<8x1280xf32>
      %45 = vector.broadcast %32 : vector<8x1xf32> to vector<8x1280xf32>
      %46 = arith.subf %44, %45 : vector<8x1280xf32>
      %47 = math.exp %46 : vector<8x1280xf32>
      %48 = vector.broadcast %34 : vector<8x1xf32> to vector<8x1280xf32>
      %49 = arith.mulf %47, %48 : vector<8x1280xf32>
      %c0_30 = arith.constant 0 : index
      %c1280 = arith.constant 1280 : index
      %50 = vector.load %arg9[%c0_30, %c1280] : memref<8x5120xf32, #tpu.memory_space<vmem>>, vector<8x1280xf32>
      tpu.vector_store %arg9[%c0_30, %c1280], %49 {strides = array<i32>} : memref<8x5120xf32, #tpu.memory_space<vmem>>, vector<8x1280xf32>,
      %c2 = arith.constant 2 : index
      %c0_31 = arith.constant 0 : index
      %c0_32 = arith.constant 0 : index
      %51 = vector.load %arg11[%c2, %c0_31, %c0_32] : memref<4x8x1280xf32, #tpu.memory_space<vmem>>, vector<1x8x1280xf32>
      %52 = vector.shape_cast %51 : vector<1x8x1280xf32> to vector<8x1280xf32>
      %53 = vector.broadcast %32 : vector<8x1xf32> to vector<8x1280xf32>
      %54 = arith.subf %52, %53 : vector<8x1280xf32>
      %55 = math.exp %54 : vector<8x1280xf32>
      %56 = vector.broadcast %34 : vector<8x1xf32> to vector<8x1280xf32>
      %57 = arith.mulf %55, %56 : vector<8x1280xf32>
      %c0_33 = arith.constant 0 : index
      %c2560 = arith.constant 2560 : index
      %58 = vector.load %arg9[%c0_33, %c2560] : memref<8x5120xf32, #tpu.memory_space<vmem>>, vector<8x1280xf32>
      tpu.vector_store %arg9[%c0_33, %c2560], %57 {strides = array<i32>} : memref<8x5120xf32, #tpu.memory_space<vmem>>, vector<8x1280xf32>,
      %c3 = arith.constant 3 : index
      %c0_34 = arith.constant 0 : index
      %c0_35 = arith.constant 0 : index
      %59 = vector.load %arg11[%c3, %c0_34, %c0_35] : memref<4x8x1280xf32, #tpu.memory_space<vmem>>, vector<1x8x1280xf32>
      %60 = vector.shape_cast %59 : vector<1x8x1280xf32> to vector<8x1280xf32>
      %61 = vector.broadcast %32 : vector<8x1xf32> to vector<8x1280xf32>
      %62 = arith.subf %60, %61 : vector<8x1280xf32>
      %63 = math.exp %62 : vector<8x1280xf32>
      %64 = vector.broadcast %34 : vector<8x1xf32> to vector<8x1280xf32>
      %65 = arith.mulf %63, %64 : vector<8x1280xf32>
      %c0_36 = arith.constant 0 : index
      %c3840 = arith.constant 3840 : index
      %66 = vector.load %arg9[%c0_36, %c3840] : memref<8x5120xf32, #tpu.memory_space<vmem>>, vector<8x1280xf32>
      tpu.vector_store %arg9[%c0_36, %c3840], %65 {strides = array<i32>} : memref<8x5120xf32, #tpu.memory_space<vmem>>, vector<8x1280xf32>,
    } else {
    }
    return
  }
  func.func @transform_0(%arg0: i32, %arg1: i32) -> (i32, i32) {
    %c0_i32 = arith.constant 0 : i32
    %c0_i32_0 = arith.constant 0 : i32
    return %arg0, %c0_i32 : i32, i32
  }
  func.func @transform_1(%arg0: i32, %arg1: i32) -> (i32, i32) {
    %c0_i32 = arith.constant 0 : i32
    %c0_i32_0 = arith.constant 0 : i32
    %c0_i32_1 = arith.constant 0 : i32
    return %c0_i32, %c0_i32_0 : i32, i32
  }
  func.func @transform_2(%arg0: i32, %arg1: i32) -> (i32, i32) {
    %c0_i32 = arith.constant 0 : i32
    %c0_i32_0 = arith.constant 0 : i32
    %c0_i32_1 = arith.constant 0 : i32
    return %c0_i32, %c0_i32_0 : i32, i32
  }
  func.func @transform_3(%arg0: i32, %arg1: i32) -> (i32, i32) {
    %c0_i32 = arith.constant 0 : i32
    %c0_i32_0 = arith.constant 0 : i32
    %c0_i32_1 = arith.constant 0 : i32
    return %c0_i32, %c0_i32_0 : i32, i32
  }
  func.func @transform_4(%arg0: i32, %arg1: i32) -> (i32, i32) {
    %c0_i32 = arith.constant 0 : i32
    %c0_i32_0 = arith.constant 0 : i32
    %c0_i32_1 = arith.constant 0 : i32
    return %c0_i32, %c0_i32_0 : i32, i32
  }
  func.func @transform_5(%arg0: i32, %arg1: i32) -> (i32, i32) {
    %c0_i32 = arith.constant 0 : i32
    %c0_i32_0 = arith.constant 0 : i32
    return %c0_i32, %arg1 : i32, i32
  }
  func.func @transform_6(%arg0: i32, %arg1: i32) -> (i32, i32) {
    %c0_i32 = arith.constant 0 : i32
    %c0_i32_0 = arith.constant 0 : i32
    return %c0_i32, %arg1 : i32, i32
  }
  func.func @transform_7(%arg0: i32, %arg1: i32) -> (i32, i32) {
    %c0_i32 = arith.constant 0 : i32
    %c0_i32_0 = arith.constant 0 : i32
    return %arg0, %c0_i32 : i32, i32
  }
}

</mosaic_0001>

<llo_original>
// kernel: tpu_custom_call.1
$region0: #{tpu_custom_call.1}
  #allocation0 [shape = 'u32[]', space=smem, size = 0x4, offset = 0x4, fixed_abs, tag = 'smem constant byte address 0x4 - core index']
  #allocation1 [shape = 'u32[144,128]{1,0:T(1,128)}', space=vmem, size = 0x12000, scoped, tag = 'internal scratch']
  #allocation2 [shape = 'bf16[8,256]{1,0:T(8,128)(2,1)}', space=vmem, size = 0x1000, scoped, tag = 'scratch operand']
  #allocation3 [shape = 'f32[4,8,1280]{2,1,0:T(8,128)}', space=vmem, size = 0x28000, scoped, tag = 'scratch operand']
  #allocation4 [shape = 'f32[8,1]{1,0:T(8,128)}', space=vmem, size = 0x1000, scoped, tag = 'scratch operand']
  #allocation5 [shape = 'f32[8,1]{1,0:T(8,128)}', space=vmem, size = 0x1000, scoped, tag = 'scratch operand']
  %s0 = inlined_call_operand.hbm [shape: f32[8,896], index: 0, kind: input, shape index: {}]
  %s1 = inlined_call_operand.hbm [shape: bf16[896,256], index: 1, kind: input, shape index: {}]
  %s2 = inlined_call_operand.hbm [shape: f32[1,256], index: 2, kind: input, shape index: {}]
  %s3 = inlined_call_operand.hbm [shape: bf16[256,256], index: 3, kind: input, shape index: {}]
  %s4 = inlined_call_operand.hbm [shape: f32[1,256], index: 4, kind: input, shape index: {}]
  %s5 = inlined_call_operand.hbm [shape: bf16[256,5120], index: 5, kind: input, shape index: {}]
  %s6 = inlined_call_operand.hbm [shape: f32[1,5120], index: 6, kind: input, shape index: {}]
  %s7 = inlined_call_operand.hbm [shape: f32[8,5120], index: 7, kind: output, shape index: {}]
  %s8 = sld [smem:[#allocation0]]
  $region97: #{tpu_custom_call.1} parent=0
    _
  %s10 = ssub.s32 1, %s8
  %s11 = scalar_select 0, %s10, %s8
  $region1: #{tpu_custom_call.1} parent=0
    #allocation6 [shape = 'u8[28672]{0}', space=vmem, size = 0x7000, scoped, tag = 'input window, operand 0, single buffered']
    #allocation7 [shape = 's32[2]{0}', space=sflag, size = 0x8, scoped, tag = 'scoped memory for tpu_custom_call.1']
    #allocation8 [shape = 's32[2]{0}', space=sflag, size = 0x8, scoped, tag = 'scoped memory for tpu_custom_call.1']
    #allocation9 [shape = 'u8[458752]{0}', space=vmem, size = 0x70000, scoped, tag = 'input window, operand 1, single buffered']
    #allocation10 [shape = 's32[1]{0}', space=sflag, size = 0x4, scoped, tag = 'scoped memory for tpu_custom_call.1']
    #allocation11 [shape = 'u8[1024]{0}', space=vmem, size = 0x400, scoped, tag = 'input window, operand 2, single buffered']
    #allocation12 [shape = 'u8[131072]{0}', space=vmem, size = 0x20000, scoped, tag = 'input window, operand 3, single buffered']
    #allocation13 [shape = 's32[1]{0}', space=sflag, size = 0x4, scoped, tag = 'scoped memory for tpu_custom_call.1']
    #allocation14 [shape = 'u8[1024]{0}', space=vmem, size = 0x400, scoped, tag = 'input window, operand 4, single buffered']
    #allocation15 [shape = 'u8[1310720]{0}', space=vmem, size = 0x140000, scoped, tag = 'input window, operand 5']
    #allocation16 [shape = 's32[2]{0}', space=sflag, size = 0x8, scoped, tag = 'scoped memory for tpu_custom_call.1']
    #allocation17 [shape = 'u8[10240]{0}', space=vmem, size = 0x2800, scoped, tag = 'input window, operand 6']
    #allocation18 [shape = 'u8[163840]{0}', space=vmem, size = 0x28000, scoped, tag = 'output window, operand 0, single buffered']
    %12 = vsyncpa [#allocation7], 0
    %13 = vsyncpa [#allocation10], 0
    %14 = vsyncpa [#allocation13], 0
    %15 = vsyncpa [#allocation16], 0
    %s16 = scalar_lea.sflag [#allocation16], 1
    %17 = vsyncpa %s16, 0
    %18 = vsyncpa [#allocation8], 0
    loop: start=0, step=1, limit=6
    $region2: #{tpu_custom_call.1} parent=1 // loop_pre_header
      _
    $region3: #{tpu_custom_call.1} parent=1 // loop_header
      %s20 = sphi 0, %s24
      %p21 = scmp.ge.s32.totalorder %s20, 6
      %s27 = sphi 0, %s39
      %s28 = sphi 0, %s35
      %s29 = sphi 0, %s27
      %s30 = sphi 0, %s28
      %s31 = sphi 0, %s29
      %s32 = sphi 0, %s30
      %s42 = sphi 0, %s44
      %s45 = sphi 0, %s42
      %s46 = sphi 0, %s45
      %s62 = sphi 0, %s46
      %s66 = sphi 0, %s66
      %s68 = sphi 0, %s66
      %s69 = sphi 0, %s68
      %s83 = sphi 0, %s69
      %s87 = sphi 0, %s87
      %s89 = sphi 0, %s87
      %s90 = sphi 0, %s89
      %s104 = sphi 0, %s90
      %s108 = sphi 0, %s108
      %s110 = sphi 0, %s108
      %s111 = sphi 0, %s110
      %s125 = sphi 0, %s111
      %s129 = sphi 0, %s129
      %s131 = sphi 0, %s129
      %s132 = sphi 0, %s131
      %s146 = sphi 0, %s132
      %s152 = sphi 0, %s154
      %s155 = sphi 0, %s152
      %s156 = sphi 0, %s155
      %s172 = sphi 0, %s156
      %s178 = sphi 0, %s180
      %s181 = sphi 0, %s178
      %s182 = sphi 0, %s181
      %s198 = sphi 0, %s182
      %s204 = sphi 0, %s206
      %s207 = sphi 0, %s204
      %s208 = sphi 0, %s207
      %s224 = sphi 0, %s208
    $region4: #{tpu_custom_call.1} parent=1 // loop_header_branch
      %23 = sbr.rel (%p21) target = $region8
    $region5: #{tpu_custom_call.1} parent=1 // loop_body
      %s25 = ssub.s32 %s20, 1
      %s26 = ssub.s32 %s20, 2
      %s33 = sadd.s32 1, %s28
      %p34 = scmp.ge.s32.totalorder %s33, 4
      %s35 = scalar_select %p34, 0, %s33
      %s36 = sadd.s32 1, %s27
      %s37 = scalar_select %p34, %s36, %s27
      %p38 = scmp.ge.s32.totalorder %s37, 1
      %s39 = scalar_select %p38, 0, %s37
      %s40 = ssub.s32 %s27, %s39
      %p41 = scmp.eq.s32.totalorder %s40, 0
      %s43 = sadd.s32 %s42, 1
      %s44 = scalar_select %p41, %s42, %s43
      %p47 = pneg %p41
      %p48 = scmp.eq.s32.totalorder %s20, 3
      %p49 = por %p47, %p48
      %p50 = scmp.ne.s32.totalorder %s42, %s45
      %p51 = scmp.eq.s32.totalorder %s20, 0
      %p52 = por %p50, %p51
      %p53 = scmp.ne.s32.totalorder %s42, %s45
      %p54 = scmp.eq.s32.totalorder %s25, 3
      %p55 = por %p53, %p54
      %p56 = scmp.ne.s32.totalorder %s45, %s46
      %p57 = scmp.eq.s32.totalorder %s25, 0
      %p58 = por %p56, %p57
      %p59 = scmp.ne.s32.totalorder %s45, %s46
      %p60 = scmp.eq.s32.totalorder %s26, 3
      %p61 = por %p59, %p60
      %p63 = scmp.ne.s32.totalorder %s46, %s62
      %p64 = scmp.eq.s32.totalorder %s26, 0
      %p65 = por %p63, %p64
      %s67 = sadd.s32 %s66, 1
      %p70 = scmp.eq.s32.totalorder %s20, 3
      %p71 = scmp.ne.s32.totalorder %s66, %s68
      %p72 = scmp.eq.s32.totalorder %s20, 0
      %p73 = por %p71, %p72
      %p74 = scmp.ne.s32.totalorder %s66, %s68
      %p75 = scmp.eq.s32.totalorder %s25, 3
      %p76 = por %p74, %p75
      %p77 = scmp.ne.s32.totalorder %s68, %s69
      %p78 = scmp.eq.s32.totalorder %s25, 0
      %p79 = por %p77, %p78
      %p80 = scmp.ne.s32.totalorder %s68, %s69
      %p81 = scmp.eq.s32.totalorder %s26, 3
      %p82 = por %p80, %p81
      %p84 = scmp.ne.s32.totalorder %s69, %s83
      %p85 = scmp.eq.s32.totalorder %s26, 0
      %p86 = por %p84, %p85
      %s88 = sadd.s32 %s87, 1
      %p91 = scmp.eq.s32.totalorder %s20, 3
      %p92 = scmp.ne.s32.totalorder %s87, %s89
      %p93 = scmp.eq.s32.totalorder %s20, 0
      %p94 = por %p92, %p93
      %p95 = scmp.ne.s32.totalorder %s87, %s89
      %p96 = scmp.eq.s32.totalorder %s25, 3
      %p97 = por %p95, %p96
      %p98 = scmp.ne.s32.totalorder %s89, %s90
      %p99 = scmp.eq.s32.totalorder %s25, 0
      %p100 = por %p98, %p99
      %p101 = scmp.ne.s32.totalorder %s89, %s90
      %p102 = scmp.eq.s32.totalorder %s26, 3
      %p103 = por %p101, %p102
      %p105 = scmp.ne.s32.totalorder %s90, %s104
      %p106 = scmp.eq.s32.totalorder %s26, 0
      %p107 = por %p105, %p106
      %s109 = sadd.s32 %s108, 1
      %p112 = scmp.eq.s32.totalorder %s20, 3
      %p113 = scmp.ne.s32.totalorder %s108, %s110
      %p114 = scmp.eq.s32.totalorder %s20, 0
      %p115 = por %p113, %p114
      %p116 = scmp.ne.s32.totalorder %s108, %s110
      %p117 = scmp.eq.s32.totalorder %s25, 3
      %p118 = por %p116, %p117
      %p119 = scmp.ne.s32.totalorder %s110, %s111
      %p120 = scmp.eq.s32.totalorder %s25, 0
      %p121 = por %p119, %p120
      %p122 = scmp.ne.s32.totalorder %s110, %s111
      %p123 = scmp.eq.s32.totalorder %s26, 3
      %p124 = por %p122, %p123
      %p126 = scmp.ne.s32.totalorder %s111, %s125
      %p127 = scmp.eq.s32.totalorder %s26, 0
      %p128 = por %p126, %p127
      %s130 = sadd.s32 %s129, 1
      %p133 = scmp.eq.s32.totalorder %s20, 3
      %p134 = scmp.ne.s32.totalorder %s129, %s131
      %p135 = scmp.eq.s32.totalorder %s20, 0
      %p136 = por %p134, %p135
      %p137 = scmp.ne.s32.totalorder %s129, %s131
      %p138 = scmp.eq.s32.totalorder %s25, 3
      %p139 = por %p137, %p138
      %p140 = scmp.ne.s32.totalorder %s131, %s132
      %p141 = scmp.eq.s32.totalorder %s25, 0
      %p142 = por %p140, %p141
      %p143 = scmp.ne.s32.totalorder %s131, %s132
      %p144 = scmp.eq.s32.totalorder %s26, 3
      %p145 = por %p143, %p144
      %p147 = scmp.ne.s32.totalorder %s132, %s146
      %p148 = scmp.eq.s32.totalorder %s26, 0
      %p149 = por %p147, %p148
      %s150 = ssub.s32 %s28, %s35
      %p151 = scmp.eq.s32.totalorder %s150, 0
      %s153 = sadd.s32 %s152, 1
      %s154 = scalar_select %p151, %s152, %s153
      %p157 = pneg %p151
      %p158 = scmp.eq.s32.totalorder %s20, 3
      %p159 = por %p157, %p158
      %p160 = scmp.ne.s32.totalorder %s152, %s155
      %p161 = scmp.eq.s32.totalorder %s20, 0
      %p162 = por %p160, %p161
      %p163 = scmp.ne.s32.totalorder %s152, %s155
      %p164 = scmp.eq.s32.totalorder %s25, 3
      %p165 = por %p163, %p164
      %p166 = scmp.ne.s32.totalorder %s155, %s156
      %p167 = scmp.eq.s32.totalorder %s25, 0
      %p168 = por %p166, %p167
      %p169 = scmp.ne.s32.totalorder %s155, %s156
      %p170 = scmp.eq.s32.totalorder %s26, 3
      %p171 = por %p169, %p170
      %p173 = scmp.ne.s32.totalorder %s156, %s172
      %p174 = scmp.eq.s32.totalorder %s26, 0
      %p175 = por %p173, %p174
      %s176 = ssub.s32 %s28, %s35
      %p177 = scmp.eq.s32.totalorder %s176, 0
      %s179 = sadd.s32 %s178, 1
      %s180 = scalar_select %p177, %s178, %s179
      %p183 = pneg %p177
      %p184 = scmp.eq.s32.totalorder %s20, 3
      %p185 = por %p183, %p184
      %p186 = scmp.ne.s32.totalorder %s178, %s181
      %p187 = scmp.eq.s32.totalorder %s20, 0
      %p188 = por %p186, %p187
      %p189 = scmp.ne.s32.totalorder %s178, %s181
      %p190 = scmp.eq.s32.totalorder %s25, 3
      %p191 = por %p189, %p190
      %p192 = scmp.ne.s32.totalorder %s181, %s182
      %p193 = scmp.eq.s32.totalorder %s25, 0
      %p194 = por %p192, %p193
      %p195 = scmp.ne.s32.totalorder %s181, %s182
      %p196 = scmp.eq.s32.totalorder %s26, 3
      %p197 = por %p195, %p196
      %p199 = scmp.ne.s32.totalorder %s182, %s198
      %p200 = scmp.eq.s32.totalorder %s26, 0
      %p201 = por %p199, %p200
      %s202 = ssub.s32 %s27, %s39
      %p203 = scmp.eq.s32.totalorder %s202, 0
      %s205 = sadd.s32 %s204, 1
      %s206 = scalar_select %p203, %s204, %s205
      %p209 = pneg %p203
      %p210 = scmp.eq.s32.totalorder %s20, 3
      %p211 = por %p209, %p210
      %p212 = scmp.ne.s32.totalorder %s204, %s207
      %p213 = scmp.eq.s32.totalorder %s20, 0
      %p214 = por %p212, %p213
      %p215 = scmp.ne.s32.totalorder %s204, %s207
      %p216 = scmp.eq.s32.totalorder %s25, 3
      %p217 = por %p215, %p216
      %p218 = scmp.ne.s32.totalorder %s207, %s208
      %p219 = scmp.eq.s32.totalorder %s25, 0
      %p220 = por %p218, %p219
      %p221 = scmp.ne.s32.totalorder %s207, %s208
      %p222 = scmp.eq.s32.totalorder %s26, 3
      %p223 = por %p221, %p222
      %p225 = scmp.ne.s32.totalorder %s208, %s224
      %p226 = scmp.eq.s32.totalorder %s26, 0
      %p227 = por %p225, %p226
      %p228 = scmp.le.s32.totalorder 1, %s20
      %p229 = scmp.lt.s32.totalorder %s20, 5
      %p230 = pnand %p228, %p229
      %p231 = pneg %p230
      // Predicated region
      $region9: #{tpu_custom_call.1} parent=5 // pred_check
        _
      $region10: #{tpu_custom_call.1} parent=5 // pred_check_branch
        %233 = sbr.rel (%p230) target = $region12
      $region11: #{tpu_custom_call.1} parent=5 // pred_region
        %s234 = ssub.s32 %s20, 1
        // Predicated region
        $region13: #{tpu_custom_call.1} parent=11 // pred_check
          %p235 = pneg %p58
        $region14: #{tpu_custom_call.1} parent=11 // pred_check_branch
          %237 = sbr.rel (%p235) target = $region16
        $region15: #{tpu_custom_call.1} parent=11 // pred_region
          %s239 = ssub.s32 896, 896
          %240 = vsyncadd [#allocation7], %s239
          %s241 = smul.addr %s29, 7
          %s242 = smul.addr %s241, 128
          %s243 = scalar_lea.hbm %s0, %s242
          %s245 = sshll.u32 [#allocation6], 4
          %s246 = int_to_ptr.vmem [resolvable:$true] %s245
          %248 = dma.hbm_to_vmem [thread:$0]  %s243, 896, %s246, [#allocation7]
        $region16: #{tpu_custom_call.1} parent=11 // pred_fallthru
          _
        // Predicated region
        $region17: #{tpu_custom_call.1} parent=11 // pred_check
          %p249 = pneg %p79
        $region18: #{tpu_custom_call.1} parent=11 // pred_check_branch
          %251 = sbr.rel (%p249) target = $region20
        $region19: #{tpu_custom_call.1} parent=11 // pred_region
          %s253 = ssub.s32 14336, 14336
          %254 = vsyncadd [#allocation10], %s253
          %s255 = sshll.u32 [#allocation9], 4
          %s256 = int_to_ptr.vmem [resolvable:$true] %s255
          %261 = dma.hbm_to_vmem [thread:$0]  %s1, 14336, %s256, [#allocation10], 128, 128, 8
        $region20: #{tpu_custom_call.1} parent=11 // pred_fallthru
          _
        // Predicated region
        $region21: #{tpu_custom_call.1} parent=11 // pred_check
          %p262 = pneg %p100
        $region22: #{tpu_custom_call.1} parent=11 // pred_check_branch
          %264 = sbr.rel (%p262) target = $region24
        $region23: #{tpu_custom_call.1} parent=11 // pred_region
          %s266 = ssub.s32 32, 32
          %267 = vsyncadd [#allocation10], %s266
          %s269 = sshll.u32 [#allocation11], 4
          %s270 = int_to_ptr.vmem [resolvable:$true] %s269
          %272 = dma.hbm_to_vmem [thread:$0]  %s2, 32, %s270, [#allocation10]
        $region24: #{tpu_custom_call.1} parent=11 // pred_fallthru
          _
        // Predicated region
        $region25: #{tpu_custom_call.1} parent=11 // pred_check
          %p273 = pneg %p121
        $region26: #{tpu_custom_call.1} parent=11 // pred_check_branch
          %275 = sbr.rel (%p273) target = $region28
        $region27: #{tpu_custom_call.1} parent=11 // pred_region
          %s277 = ssub.s32 4096, 4096
          %278 = vsyncadd [#allocation13], %s277
          %s279 = sshll.u32 [#allocation12], 4
          %s280 = int_to_ptr.vmem [resolvable:$true] %s279
          %285 = dma.hbm_to_vmem [thread:$0]  %s3, 4096, %s280, [#allocation13], 128, 128, 8
        $region28: #{tpu_custom_call.1} parent=11 // pred_fallthru
          _
        // Predicated region
        $region29: #{tpu_custom_call.1} parent=11 // pred_check
          %p286 = pneg %p142
        $region30: #{tpu_custom_call.1} parent=11 // pred_check_branch
          %288 = sbr.rel (%p286) target = $region32
        $region31: #{tpu_custom_call.1} parent=11 // pred_region
          %s290 = ssub.s32 32, 32
          %291 = vsyncadd [#allocation13], %s290
          %s293 = sshll.u32 [#allocation14], 4
          %s294 = int_to_ptr.vmem [resolvable:$true] %s293
          %296 = dma.hbm_to_vmem [thread:$0]  %s4, 32, %s294, [#allocation13]
        $region32: #{tpu_custom_call.1} parent=11 // pred_fallthru
          _
      $region12: #{tpu_custom_call.1} parent=5 // pred_fallthru
        _
      %p297 = scmp.lt.s32.totalorder %s20, 4
      // Predicated region
      $region33: #{tpu_custom_call.1} parent=5 // pred_check
        %p298 = pneg %p297
      $region34: #{tpu_custom_call.1} parent=5 // pred_check_branch
        %300 = sbr.rel (%p298) target = $region36
      $region35: #{tpu_custom_call.1} parent=5 // pred_region
        // Predicated region
        $region37: #{tpu_custom_call.1} parent=35 // pred_check
          %p301 = pneg %p162
        $region38: #{tpu_custom_call.1} parent=35 // pred_check_branch
          %303 = sbr.rel (%p301) target = $region40
        $region39: #{tpu_custom_call.1} parent=35 // pred_region
          %s304 = sand.u32 %s20, 1
          %s305 = scalar_lea.sflag [#allocation16], %s304
          %s306 = sand.u32 %s152, 1
          %s307 = smul.addr %s306, 1280
          %s308 = scalar_lea.vmem [#allocation15], %s307
          %s309 = smul.u32 10, %s28
          %s311 = ssub.s32 20480, 20480
          %312 = vsyncadd %s305, %s311
          %s313 = smul.addr %s309, 64
          %s314 = scalar_lea.hbm %s5, %s313
          %s315 = sshll.u32 %s308, 4
          %s316 = int_to_ptr.vmem [resolvable:$true] %s315
          %321 = dma.hbm_to_vmem [thread:$0]  %s314, 20480, %s316, %s305, 2560, 640, 40
        $region40: #{tpu_custom_call.1} parent=35 // pred_fallthru
          _
        // Predicated region
        $region41: #{tpu_custom_call.1} parent=35 // pred_check
          %p322 = pneg %p188
        $region42: #{tpu_custom_call.1} parent=35 // pred_check_branch
          %324 = sbr.rel (%p322) target = $region44
        $region43: #{tpu_custom_call.1} parent=35 // pred_region
          %s325 = sand.u32 %s20, 1
          %s326 = scalar_lea.sflag [#allocation16], %s325
          %s327 = sand.u32 %s178, 1
          %s328 = smul.addr %s327, 10
          %s329 = scalar_lea.vmem [#allocation17], %s328
          %s330 = smul.u32 10, %s28
          %s332 = ssub.s32 160, 160
          %333 = vsyncadd %s326, %s332
          %s334 = smul.addr %s330, 16
          %s335 = scalar_lea.hbm %s6, %s334
          %s337 = sshll.u32 %s329, 4
          %s338 = int_to_ptr.vmem [resolvable:$true] %s337
          %340 = dma.hbm_to_vmem [thread:$0]  %s335, 160, %s338, %s326
        $region44: #{tpu_custom_call.1} parent=35 // pred_fallthru
          _
      $region36: #{tpu_custom_call.1} parent=5 // pred_fallthru
        _
      %p341 = scmp.le.s32.totalorder 1, %s20
      %p342 = scmp.lt.s32.totalorder %s20, 5
      %p343 = pnand %p341, %p342
      %p344 = pneg %p343
      // Predicated region
      $region45: #{tpu_custom_call.1} parent=5 // pred_check
        _
      $region46: #{tpu_custom_call.1} parent=5 // pred_check_branch
        %346 = sbr.rel (%p343) target = $region48
      $region47: #{tpu_custom_call.1} parent=5 // pred_region
        %s347 = ssub.s32 %s20, 1
        // Predicated region
        $region49: #{tpu_custom_call.1} parent=47 // pred_check
          %p348 = pneg %p58
        $region50: #{tpu_custom_call.1} parent=47 // pred_check_branch
          %350 = sbr.rel (%p348) target = $region52
        $region51: #{tpu_custom_call.1} parent=47 // pred_region
          %351 = dma.done [#allocation7], 896
        $region52: #{tpu_custom_call.1} parent=47 // pred_fallthru
          _
        // Predicated region
        $region53: #{tpu_custom_call.1} parent=47 // pred_check
          %p352 = pneg %p79
        $region54: #{tpu_custom_call.1} parent=47 // pred_check_branch
          %354 = sbr.rel (%p352) target = $region56
        $region55: #{tpu_custom_call.1} parent=47 // pred_region
          %355 = dma.done [#allocation10], 14336
        $region56: #{tpu_custom_call.1} parent=47 // pred_fallthru
          _
        // Predicated region
        $region57: #{tpu_custom_call.1} parent=47 // pred_check
          %p356 = pneg %p100
        $region58: #{tpu_custom_call.1} parent=47 // pred_check_branch
          %358 = sbr.rel (%p356) target = $region60
        $region59: #{tpu_custom_call.1} parent=47 // pred_region
          %359 = dma.done [#allocation10], 32
        $region60: #{tpu_custom_call.1} parent=47 // pred_fallthru
          _
        // Predicated region
        $region61: #{tpu_custom_call.1} parent=47 // pred_check
          %p360 = pneg %p121
        $region62: #{tpu_custom_call.1} parent=47 // pred_check_branch
          %362 = sbr.rel (%p360) target = $region64
        $region63: #{tpu_custom_call.1} parent=47 // pred_region
          %363 = dma.done [#allocation13], 4096
        $region64: #{tpu_custom_call.1} parent=47 // pred_fallthru
          _
        // Predicated region
        $region65: #{tpu_custom_call.1} parent=47 // pred_check
          %p364 = pneg %p142
        $region66: #{tpu_custom_call.1} parent=47 // pred_check_branch
          %366 = sbr.rel (%p364) target = $region68
        $region67: #{tpu_custom_call.1} parent=47 // pred_region
          %367 = dma.done [#allocation13], 32
        $region68: #{tpu_custom_call.1} parent=47 // pred_fallthru
          _
        %s368 = sand.u32 %s25, 1
        %s369 = scalar_lea.sflag [#allocation16], %s368
        %s370 = sand.u32 %s155, 1
        %s371 = smul.addr %s370, 1280
        %s372 = scalar_lea.vmem [#allocation15], %s371
        // Predicated region
        $region69: #{tpu_custom_call.1} parent=47 // pred_check
          %p373 = pneg %p168
        $region70: #{tpu_custom_call.1} parent=47 // pred_check_branch
          %375 = sbr.rel (%p373) target = $region72
        $region71: #{tpu_custom_call.1} parent=47 // pred_region
          %376 = dma.done %s369, 20480
        $region72: #{tpu_custom_call.1} parent=47 // pred_fallthru
          _
        %s377 = sand.u32 %s25, 1
        %s378 = scalar_lea.sflag [#allocation16], %s377
        %s379 = sand.u32 %s181, 1
        %s380 = smul.addr %s379, 10
        %s381 = scalar_lea.vmem [#allocation17], %s380
        // Predicated region
        $region73: #{tpu_custom_call.1} parent=47 // pred_check
          %p382 = pneg %p194
        $region74: #{tpu_custom_call.1} parent=47 // pred_check_branch
          %384 = sbr.rel (%p382) target = $region76
        $region75: #{tpu_custom_call.1} parent=47 // pred_region
          %385 = dma.done %s378, 160
        $region76: #{tpu_custom_call.1} parent=47 // pred_fallthru
          _
        %p386 = pneg %p58
        %p387 = pneg %p55
        %p388 = pneg %p79
        %p389 = pneg %p76
        %p390 = pneg %p100
        %p391 = pneg %p97
        %p392 = pneg %p121
        %p393 = pneg %p118
        %p394 = pneg %p142
        %p395 = pneg %p139
        %s396 = sand.u32 %s25, 1
        %s397 = scalar_lea.sflag [#allocation16], %s396
        %s398 = sand.u32 %s155, 1
        %s399 = smul.addr %s398, 1280
        %s400 = scalar_lea.vmem [#allocation15], %s399
        %p401 = pneg %p168
        %p402 = pneg %p165
        %s403 = sand.u32 %s25, 1
        %s404 = scalar_lea.sflag [#allocation16], %s403
        %s405 = sand.u32 %s181, 1
        %s406 = smul.addr %s405, 10
        %s407 = scalar_lea.vmem [#allocation17], %s406
        %p408 = pneg %p194
        %p409 = pneg %p191
        %p410 = pneg %p220
        %p411 = pneg %p217
        %s412 = smul.u32 10, %s30
        %s413 = smul.u32 10, %s30
        %p415 = scmp.eq.s32.totalorder %s30, 0
        // Predicated region
        $region77: #{tpu_custom_call.1} parent=47 // pred_check
          %p416 = pneg %p415
        $region78: #{tpu_custom_call.1} parent=47 // pred_check_branch
          %418 = sbr.rel (%p416) target = $region80
        $region79: #{tpu_custom_call.1} parent=47 // pred_region
          %v419 = vld [vmem:[#allocation6] sm:$0xff]
          %v420 = vld [vmem:[#allocation6 + $0x8] sm:$0xff]
          %v421 = vld [vmem:[#allocation6 + $0x10] sm:$0xff]
          %v422 = vld [vmem:[#allocation6 + $0x18] sm:$0xff]
          %v423 = vld [vmem:[#allocation6 + $0x20] sm:$0xff]
          %v424 = vld [vmem:[#allocation6 + $0x28] sm:$0xff]
          %v425 = vld [vmem:[#allocation6 + $0x30] sm:$0xff]
          %v426 = vpack.c.bf16 %v419, %v419
          %v427 = vpack.c.bf16 %v420, %v420
          %v428 = vpack.c.bf16 %v421, %v421
          %v429 = vpack.c.bf16 %v422, %v422
          %v430 = vpack.c.bf16 %v423, %v423
          %v431 = vpack.c.bf16 %v424, %v424
          %v432 = vpack.c.bf16 %v425, %v425
          %v433 = vld [vmem:[#allocation9] sm:$0xff]
          %v434 = vld [vmem:[#allocation9 + $0x8] sm:$0xff]
          %v435 = vld [vmem:[#allocation9 + $0x10] sm:$0xff]
          %v436 = vld [vmem:[#allocation9 + $0x18] sm:$0xff]
          %v437 = vld [vmem:[#allocation9 + $0x20] sm:$0xff]
          %v438 = vld [vmem:[#allocation9 + $0x28] sm:$0xff]
          %v439 = vld [vmem:[#allocation9 + $0x30] sm:$0xff]
          %v440 = vld [vmem:[#allocation9 + $0x38] sm:$0xff]
          %v441 = vld [vmem:[#allocation9 + $0x40] sm:$0xff]
          %v442 = vld [vmem:[#allocation9 + $0x48] sm:$0xff]
          %v443 = vld [vmem:[#allocation9 + $0x50] sm:$0xff]
          %v444 = vld [vmem:[#allocation9 + $0x58] sm:$0xff]
          %v445 = vld [vmem:[#allocation9 + $0x60] sm:$0xff]
          %v446 = vld [vmem:[#allocation9 + $0x68] sm:$0xff]
          %v447 = vld [vmem:[#allocation9 + $0x70] sm:$0xff]
          %v448 = vld [vmem:[#allocation9 + $0x78] sm:$0xff]
          %v449 = vld [vmem:[#allocation9 + $0x80] sm:$0xff]
          %v450 = vld [vmem:[#allocation9 + $0x88] sm:$0xff]
          %v451 = vld [vmem:[#allocation9 + $0x90] sm:$0xff]
          %v452 = vld [vmem:[#allocation9 + $0x98] sm:$0xff]
          %v453 = vld [vmem:[#allocation9 + $0xa0] sm:$0xff]
          %v454 = vld [vmem:[#allocation9 + $0xa8] sm:$0xff]
          %v455 = vld [vmem:[#allocation9 + $0xb0] sm:$0xff]
          %v456 = vld [vmem:[#allocation9 + $0xb8] sm:$0xff]
          %v457 = vld [vmem:[#allocation9 + $0xc0] sm:$0xff]
          %v458 = vld [vmem:[#allocation9 + $0xc8] sm:$0xff]
          %v459 = vld [vmem:[#allocation9 + $0xd0] sm:$0xff]
          %v460 = vld [vmem:[#allocation9 + $0xd8] sm:$0xff]
          %v461 = vld [vmem:[#allocation9 + $0xe0] sm:$0xff]
          %v462 = vld [vmem:[#allocation9 + $0xe8] sm:$0xff]
          %v463 = vld [vmem:[#allocation9 + $0xf0] sm:$0xff]
          %v464 = vld [vmem:[#allocation9 + $0xf8] sm:$0xff]
          %v465 = vld [vmem:[#allocation9 + $0x100] sm:$0xff]
          %v466 = vld [vmem:[#allocation9 + $0x108] sm:$0xff]
          %v467 = vld [vmem:[#allocation9 + $0x110] sm:$0xff]
          %v468 = vld [vmem:[#allocation9 + $0x118] sm:$0xff]
          %v469 = vld [vmem:[#allocation9 + $0x120] sm:$0xff]
          %v470 = vld [vmem:[#allocation9 + $0x128] sm:$0xff]
          %v471 = vld [vmem:[#allocation9 + $0x130] sm:$0xff]
          %v472 = vld [vmem:[#allocation9 + $0x138] sm:$0xff]
          %v473 = vld [vmem:[#allocation9 + $0x140] sm:$0xff]
          %v474 = vld [vmem:[#allocation9 + $0x148] sm:$0xff]
          %v475 = vld [vmem:[#allocation9 + $0x150] sm:$0xff]
          %v476 = vld [vmem:[#allocation9 + $0x158] sm:$0xff]
          %v477 = vld [vmem:[#allocation9 + $0x160] sm:$0xff]
          %v478 = vld [vmem:[#allocation9 + $0x168] sm:$0xff]
          %v479 = vld [vmem:[#allocation9 + $0x170] sm:$0xff]
          %v480 = vld [vmem:[#allocation9 + $0x178] sm:$0xff]
          %v481 = vld [vmem:[#allocation9 + $0x180] sm:$0xff]
          %v482 = vld [vmem:[#allocation9 + $0x188] sm:$0xff]
          %v483 = vld [vmem:[#allocation9 + $0x190] sm:$0xff]
          %v484 = vld [vmem:[#allocation9 + $0x198] sm:$0xff]
          %v485 = vld [vmem:[#allocation9 + $0x1a0] sm:$0xff]
          %v486 = vld [vmem:[#allocation9 + $0x1a8] sm:$0xff]
          %v487 = vld [vmem:[#allocation9 + $0x1b0] sm:$0xff]
          %v488 = vld [vmem:[#allocation9 + $0x1b8] sm:$0xff]
          %v489 = vld [vmem:[#allocation9 + $0x1c0] sm:$0xff]
          %v490 = vld [vmem:[#allocation9 + $0x1c8] sm:$0xff]
          %v491 = vld [vmem:[#allocation9 + $0x1d0] sm:$0xff]
          %v492 = vld [vmem:[#allocation9 + $0x1d8] sm:$0xff]
          %v493 = vld [vmem:[#allocation9 + $0x1e0] sm:$0xff]
          %v494 = vld [vmem:[#allocation9 + $0x1e8] sm:$0xff]
          %v495 = vld [vmem:[#allocation9 + $0x1f0] sm:$0xff]
          %v496 = vld [vmem:[#allocation9 + $0x1f8] sm:$0xff]
          %v497 = vld [vmem:[#allocation9 + $0x200] sm:$0xff]
          %v498 = vld [vmem:[#allocation9 + $0x208] sm:$0xff]
          %v499 = vld [vmem:[#allocation9 + $0x210] sm:$0xff]
          %v500 = vld [vmem:[#allocation9 + $0x218] sm:$0xff]
          %v501 = vld [vmem:[#allocation9 + $0x220] sm:$0xff]
          %v502 = vld [vmem:[#allocation9 + $0x228] sm:$0xff]
          %v503 = vld [vmem:[#allocation9 + $0x230] sm:$0xff]
          %v504 = vld [vmem:[#allocation9 + $0x238] sm:$0xff]
          %v505 = vld [vmem:[#allocation9 + $0x240] sm:$0xff]
          %v506 = vld [vmem:[#allocation9 + $0x248] sm:$0xff]
          %v507 = vld [vmem:[#allocation9 + $0x250] sm:$0xff]
          %v508 = vld [vmem:[#allocation9 + $0x258] sm:$0xff]
          %v509 = vld [vmem:[#allocation9 + $0x260] sm:$0xff]
          %v510 = vld [vmem:[#allocation9 + $0x268] sm:$0xff]
          %v511 = vld [vmem:[#allocation9 + $0x270] sm:$0xff]
          %v512 = vld [vmem:[#allocation9 + $0x278] sm:$0xff]
          %v513 = vld [vmem:[#allocation9 + $0x280] sm:$0xff]
          %v514 = vld [vmem:[#allocation9 + $0x288] sm:$0xff]
          %v515 = vld [vmem:[#allocation9 + $0x290] sm:$0xff]
          %v516 = vld [vmem:[#allocation9 + $0x298] sm:$0xff]
          %v517 = vld [vmem:[#allocation9 + $0x2a0] sm:$0xff]
          %v518 = vld [vmem:[#allocation9 + $0x2a8] sm:$0xff]
          %v519 = vld [vmem:[#allocation9 + $0x2b0] sm:$0xff]
          %v520 = vld [vmem:[#allocation9 + $0x2b8] sm:$0xff]
          %v521 = vld [vmem:[#allocation9 + $0x2c0] sm:$0xff]
          %v522 = vld [vmem:[#allocation9 + $0x2c8] sm:$0xff]
          %v523 = vld [vmem:[#allocation9 + $0x2d0] sm:$0xff]
          %v524 = vld [vmem:[#allocation9 + $0x2d8] sm:$0xff]
          %v525 = vld [vmem:[#allocation9 + $0x2e0] sm:$0xff]
          %v526 = vld [vmem:[#allocation9 + $0x2e8] sm:$0xff]
          %v527 = vld [vmem:[#allocation9 + $0x2f0] sm:$0xff]
          %v528 = vld [vmem:[#allocation9 + $0x2f8] sm:$0xff]
          %v529 = vld [vmem:[#allocation9 + $0x300] sm:$0xff]
          %v530 = vld [vmem:[#allocation9 + $0x308] sm:$0xff]
          %v531 = vld [vmem:[#allocation9 + $0x310] sm:$0xff]
          %v532 = vld [vmem:[#allocation9 + $0x318] sm:$0xff]
          %v533 = vld [vmem:[#allocation9 + $0x320] sm:$0xff]
          %v534 = vld [vmem:[#allocation9 + $0x328] sm:$0xff]
          %v535 = vld [vmem:[#allocation9 + $0x330] sm:$0xff]
          %v536 = vld [vmem:[#allocation9 + $0x338] sm:$0xff]
          %v537 = vld [vmem:[#allocation9 + $0x340] sm:$0xff]
          %v538 = vld [vmem:[#allocation9 + $0x348] sm:$0xff]
          %v539 = vld [vmem:[#allocation9 + $0x350] sm:$0xff]
          %v540 = vld [vmem:[#allocation9 + $0x358] sm:$0xff]
          %v541 = vld [vmem:[#allocation9 + $0x360] sm:$0xff]
          %v542 = vld [vmem:[#allocation9 + $0x368] sm:$0xff]
          %v543 = vld [vmem:[#allocation9 + $0x370] sm:$0xff]
          %v544 = vld [vmem:[#allocation9 + $0x378] sm:$0xff]
          %v545 = vld [vmem:[#allocation11] sm:$0x3]
          %v547 = vlaneseq
          %v548 = vshrl.u32 %v547, 7
          %v549 = vsub.s32 0, %v548
          %v550 = vrot.slane %v545, %v549
          %v551 = vlaneseq
          %v552 = vshrl.u32 %v551, 7
          %v553 = vsub.s32 1, %v552
          %v554 = vrot.slane %v545, %v553
          %v669 = vunpack.c.l.b16 %v433
          %v670 = vunpack.c.h.b16 %v433
          %v671 = vunpack.c.l.b16 %v434
          %v672 = vunpack.c.h.b16 %v434
          %v673 = vunpack.c.l.b16 %v435
          %v674 = vunpack.c.h.b16 %v435
          %v675 = vunpack.c.l.b16 %v436
          %v676 = vunpack.c.h.b16 %v436
          %v677 = vunpack.c.l.b16 %v437
          %v678 = vunpack.c.h.b16 %v437
          %v679 = vunpack.c.l.b16 %v438
          %v680 = vunpack.c.h.b16 %v438
          %v681 = vunpack.c.l.b16 %v439
          %v682 = vunpack.c.h.b16 %v439
          %v683 = vunpack.c.l.b16 %v440
          %v684 = vunpack.c.h.b16 %v440
          %v685 = vunpack.c.l.b16 %v441
          %v686 = vunpack.c.h.b16 %v441
          %v687 = vunpack.c.l.b16 %v442
          %v688 = vunpack.c.h.b16 %v442
          %v689 = vunpack.c.l.b16 %v443
          %v690 = vunpack.c.h.b16 %v443
          %v691 = vunpack.c.l.b16 %v444
          %v692 = vunpack.c.h.b16 %v444
          %v693 = vunpack.c.l.b16 %v445
          %v694 = vunpack.c.h.b16 %v445
          %v695 = vunpack.c.l.b16 %v446
          %v696 = vunpack.c.h.b16 %v446
          %v697 = vunpack.c.l.b16 %v447
          %v698 = vunpack.c.h.b16 %v447
          %v699 = vunpack.c.l.b16 %v448
          %v700 = vunpack.c.h.b16 %v448
          %v701 = vunpack.c.l.b16 %v449
          %v702 = vunpack.c.h.b16 %v449
          %v703 = vunpack.c.l.b16 %v450
          %v704 = vunpack.c.h.b16 %v450
          %v705 = vunpack.c.l.b16 %v451
          %v706 = vunpack.c.h.b16 %v451
          %v707 = vunpack.c.l.b16 %v452
          %v708 = vunpack.c.h.b16 %v452
          %v709 = vunpack.c.l.b16 %v453
          %v710 = vunpack.c.h.b16 %v453
          %v711 = vunpack.c.l.b16 %v454
          %v712 = vunpack.c.h.b16 %v454
          %v713 = vunpack.c.l.b16 %v455
          %v714 = vunpack.c.h.b16 %v455
          %v715 = vunpack.c.l.b16 %v456
          %v716 = vunpack.c.h.b16 %v456
          %v717 = vunpack.c.l.b16 %v457
          %v718 = vunpack.c.h.b16 %v457
          %v719 = vunpack.c.l.b16 %v458
          %v720 = vunpack.c.h.b16 %v458
          %v721 = vunpack.c.l.b16 %v459
          %v722 = vunpack.c.h.b16 %v459
          %v723 = vunpack.c.l.b16 %v460
          %v724 = vunpack.c.h.b16 %v460
          %v725 = vunpack.c.l.b16 %v461
          %v726 = vunpack.c.h.b16 %v461
          %v727 = vunpack.c.l.b16 %v462
          %v728 = vunpack.c.h.b16 %v462
          %v729 = vunpack.c.l.b16 %v463
          %v730 = vunpack.c.h.b16 %v463
          %v731 = vunpack.c.l.b16 %v464
          %v732 = vunpack.c.h.b16 %v464
          %v733 = vunpack.c.l.b16 %v465
          %v734 = vunpack.c.h.b16 %v465
          %v735 = vunpack.c.l.b16 %v466
          %v736 = vunpack.c.h.b16 %v466
          %v737 = vunpack.c.l.b16 %v467
          %v738 = vunpack.c.h.b16 %v467
          %v739 = vunpack.c.l.b16 %v468
          %v740 = vunpack.c.h.b16 %v468
          %v741 = vunpack.c.l.b16 %v469
          %v742 = vunpack.c.h.b16 %v469
          %v743 = vunpack.c.l.b16 %v470
          %v744 = vunpack.c.h.b16 %v470
          %v745 = vunpack.c.l.b16 %v471
          %v746 = vunpack.c.h.b16 %v471
          %v747 = vunpack.c.l.b16 %v472
          %v748 = vunpack.c.h.b16 %v472
          %v749 = vunpack.c.l.b16 %v473
          %v750 = vunpack.c.h.b16 %v473
          %v751 = vunpack.c.l.b16 %v474
          %v752 = vunpack.c.h.b16 %v474
          %v753 = vunpack.c.l.b16 %v475
          %v754 = vunpack.c.h.b16 %v475
          %v755 = vunpack.c.l.b16 %v476
          %v756 = vunpack.c.h.b16 %v476
          %v757 = vunpack.c.l.b16 %v477
          %v758 = vunpack.c.h.b16 %v477
          %v759 = vunpack.c.l.b16 %v478
          %v760 = vunpack.c.h.b16 %v478
          %v761 = vunpack.c.l.b16 %v479
          %v762 = vunpack.c.h.b16 %v479
          %v763 = vunpack.c.l.b16 %v480
          %v764 = vunpack.c.h.b16 %v480
          %v765 = vunpack.c.l.b16 %v481
          %v766 = vunpack.c.h.b16 %v481
          %v767 = vunpack.c.l.b16 %v482
          %v768 = vunpack.c.h.b16 %v482
          %v769 = vunpack.c.l.b16 %v483
          %v770 = vunpack.c.h.b16 %v483
          %v771 = vunpack.c.l.b16 %v484
          %v772 = vunpack.c.h.b16 %v484
          %v773 = vunpack.c.l.b16 %v485
          %v774 = vunpack.c.h.b16 %v485
          %v775 = vunpack.c.l.b16 %v486
          %v776 = vunpack.c.h.b16 %v486
          %v777 = vunpack.c.l.b16 %v487
          %v778 = vunpack.c.h.b16 %v487
          %v779 = vunpack.c.l.b16 %v488
          %v780 = vunpack.c.h.b16 %v488
          %v781 = vunpack.c.l.b16 %v489
          %v782 = vunpack.c.h.b16 %v489
          %v783 = vunpack.c.l.b16 %v490
          %v784 = vunpack.c.h.b16 %v490
          %v785 = vunpack.c.l.b16 %v491
          %v786 = vunpack.c.h.b16 %v491
          %v787 = vunpack.c.l.b16 %v492
          %v788 = vunpack.c.h.b16 %v492
          %v789 = vunpack.c.l.b16 %v493
          %v790 = vunpack.c.h.b16 %v493
          %v791 = vunpack.c.l.b16 %v494
          %v792 = vunpack.c.h.b16 %v494
          %v793 = vunpack.c.l.b16 %v495
          %v794 = vunpack.c.h.b16 %v495
          %v795 = vunpack.c.l.b16 %v496
          %v796 = vunpack.c.h.b16 %v496
          %v797 = vunpack.c.l.b16 %v497
          %v798 = vunpack.c.h.b16 %v497
          %v799 = vunpack.c.l.b16 %v498
          %v800 = vunpack.c.h.b16 %v498
          %v801 = vunpack.c.l.b16 %v499
          %v802 = vunpack.c.h.b16 %v499
          %v803 = vunpack.c.l.b16 %v500
          %v804 = vunpack.c.h.b16 %v500
          %v805 = vunpack.c.l.b16 %v501
          %v806 = vunpack.c.h.b16 %v501
          %v807 = vunpack.c.l.b16 %v502
          %v808 = vunpack.c.h.b16 %v502
          %v809 = vunpack.c.l.b16 %v503
          %v810 = vunpack.c.h.b16 %v503
          %v811 = vunpack.c.l.b16 %v504
          %v812 = vunpack.c.h.b16 %v504
          %v813 = vunpack.c.l.b16 %v505
          %v814 = vunpack.c.h.b16 %v505
          %v815 = vunpack.c.l.b16 %v506
          %v816 = vunpack.c.h.b16 %v506
          %v817 = vunpack.c.l.b16 %v507
          %v818 = vunpack.c.h.b16 %v507
          %v819 = vunpack.c.l.b16 %v508
          %v820 = vunpack.c.h.b16 %v508
          %v821 = vunpack.c.l.b16 %v509
          %v822 = vunpack.c.h.b16 %v509
          %v823 = vunpack.c.l.b16 %v510
          %v824 = vunpack.c.h.b16 %v510
          %v825 = vunpack.c.l.b16 %v511
          %v826 = vunpack.c.h.b16 %v511
          %v827 = vunpack.c.l.b16 %v512
          %v828 = vunpack.c.h.b16 %v512
          %v829 = vunpack.c.l.b16 %v513
          %v830 = vunpack.c.h.b16 %v513
          %v831 = vunpack.c.l.b16 %v514
          %v832 = vunpack.c.h.b16 %v514
          %v833 = vunpack.c.l.b16 %v515
          %v834 = vunpack.c.h.b16 %v515
          %v835 = vunpack.c.l.b16 %v516
          %v836 = vunpack.c.h.b16 %v516
          %v837 = vunpack.c.l.b16 %v517
          %v838 = vunpack.c.h.b16 %v517
          %v839 = vunpack.c.l.b16 %v518
          %v840 = vunpack.c.h.b16 %v518
          %v841 = vunpack.c.l.b16 %v519
          %v842 = vunpack.c.h.b16 %v519
          %v843 = vunpack.c.l.b16 %v520
          %v844 = vunpack.c.h.b16 %v520
          %v845 = vunpack.c.l.b16 %v521
          %v846 = vunpack.c.h.b16 %v521
          %v847 = vunpack.c.l.b16 %v522
          %v848 = vunpack.c.h.b16 %v522
          %v849 = vunpack.c.l.b16 %v523
          %v850 = vunpack.c.h.b16 %v523
          %v851 = vunpack.c.l.b16 %v524
          %v852 = vunpack.c.h.b16 %v524
          %v853 = vunpack.c.l.b16 %v525
          %v854 = vunpack.c.h.b16 %v525
          %v855 = vunpack.c.l.b16 %v526
          %v856 = vunpack.c.h.b16 %v526
          %v857 = vunpack.c.l.b16 %v527
          %v858 = vunpack.c.h.b16 %v527
          %v859 = vunpack.c.l.b16 %v528
          %v860 = vunpack.c.h.b16 %v528
          %v861 = vunpack.c.l.b16 %v529
          %v862 = vunpack.c.h.b16 %v529
          %v863 = vunpack.c.l.b16 %v530
          %v864 = vunpack.c.h.b16 %v530
          %v865 = vunpack.c.l.b16 %v531
          %v866 = vunpack.c.h.b16 %v531
          %v867 = vunpack.c.l.b16 %v532
          %v868 = vunpack.c.h.b16 %v532
          %v869 = vunpack.c.l.b16 %v533
          %v870 = vunpack.c.h.b16 %v533
          %v871 = vunpack.c.l.b16 %v534
          %v872 = vunpack.c.h.b16 %v534
          %v873 = vunpack.c.l.b16 %v535
          %v874 = vunpack.c.h.b16 %v535
          %v875 = vunpack.c.l.b16 %v536
          %v876 = vunpack.c.h.b16 %v536
          %v877 = vunpack.c.l.b16 %v537
          %v878 = vunpack.c.h.b16 %v537
          %v879 = vunpack.c.l.b16 %v538
          %v880 = vunpack.c.h.b16 %v538
          %v881 = vunpack.c.l.b16 %v539
          %v882 = vunpack.c.h.b16 %v539
          %v883 = vunpack.c.l.b16 %v540
          %v884 = vunpack.c.h.b16 %v540
          %v885 = vunpack.c.l.b16 %v541
          %v886 = vunpack.c.h.b16 %v541
          %v887 = vunpack.c.l.b16 %v542
          %v888 = vunpack.c.h.b16 %v542
          %v889 = vunpack.c.l.b16 %v543
          %v890 = vunpack.c.h.b16 %v543
          %v891 = vunpack.c.l.b16 %v544
          %v892 = vunpack.c.h.b16 %v544
          %v893 = vpack.c.b16 %v671, %v669
          %v894 = vpack.c.b16 %v672, %v670
          %v895 = vpack.c.b16 %v675, %v673
          %v896 = vpack.c.b16 %v676, %v674
          %v897 = vpack.c.b16 %v679, %v677
          %v898 = vpack.c.b16 %v680, %v678
          %v899 = vpack.c.b16 %v683, %v681
          %v900 = vpack.c.b16 %v684, %v682
          %v901 = vpack.c.b16 %v687, %v685
          %v902 = vpack.c.b16 %v688, %v686
          %v903 = vpack.c.b16 %v691, %v689
          %v904 = vpack.c.b16 %v692, %v690
          %v905 = vpack.c.b16 %v695, %v693
          %v906 = vpack.c.b16 %v696, %v694
          %v907 = vpack.c.b16 %v699, %v697
          %v908 = vpack.c.b16 %v700, %v698
          %v909 = vpack.c.b16 %v703, %v701
          %v910 = vpack.c.b16 %v704, %v702
          %v911 = vpack.c.b16 %v707, %v705
          %v912 = vpack.c.b16 %v708, %v706
          %v913 = vpack.c.b16 %v711, %v709
          %v914 = vpack.c.b16 %v712, %v710
          %v915 = vpack.c.b16 %v715, %v713
          %v916 = vpack.c.b16 %v716, %v714
          %v917 = vpack.c.b16 %v719, %v717
          %v918 = vpack.c.b16 %v720, %v718
          %v919 = vpack.c.b16 %v723, %v721
          %v920 = vpack.c.b16 %v724, %v722
          %v921 = vpack.c.b16 %v727, %v725
          %v922 = vpack.c.b16 %v728, %v726
          %v923 = vpack.c.b16 %v731, %v729
          %v924 = vpack.c.b16 %v732, %v730
          %v925 = vpack.c.b16 %v735, %v733
          %v926 = vpack.c.b16 %v736, %v734
          %v927 = vpack.c.b16 %v739, %v737
          %v928 = vpack.c.b16 %v740, %v738
          %v929 = vpack.c.b16 %v743, %v741
          %v930 = vpack.c.b16 %v744, %v742
          %v931 = vpack.c.b16 %v747, %v745
          %v932 = vpack.c.b16 %v748, %v746
          %v933 = vpack.c.b16 %v751, %v749
          %v934 = vpack.c.b16 %v752, %v750
          %v935 = vpack.c.b16 %v755, %v753
          %v936 = vpack.c.b16 %v756, %v754
          %v937 = vpack.c.b16 %v759, %v757
          %v938 = vpack.c.b16 %v760, %v758
          %v939 = vpack.c.b16 %v763, %v761
          %v940 = vpack.c.b16 %v764, %v762
          %v941 = vpack.c.b16 %v767, %v765
          %v942 = vpack.c.b16 %v768, %v766
          %v943 = vpack.c.b16 %v771, %v769
          %v944 = vpack.c.b16 %v772, %v770
          %v945 = vpack.c.b16 %v775, %v773
          %v946 = vpack.c.b16 %v776, %v774
          %v947 = vpack.c.b16 %v779, %v777
          %v948 = vpack.c.b16 %v780, %v778
          %v949 = vpack.c.b16 %v783, %v781
          %v950 = vpack.c.b16 %v784, %v782
          %v951 = vpack.c.b16 %v787, %v785
          %v952 = vpack.c.b16 %v788, %v786
          %v953 = vpack.c.b16 %v791, %v789
          %v954 = vpack.c.b16 %v792, %v790
          %v955 = vpack.c.b16 %v795, %v793
          %v956 = vpack.c.b16 %v796, %v794
          %v957 = vpack.c.b16 %v799, %v797
          %v958 = vpack.c.b16 %v800, %v798
          %v959 = vpack.c.b16 %v803, %v801
          %v960 = vpack.c.b16 %v804, %v802
          %v961 = vpack.c.b16 %v807, %v805
          %v962 = vpack.c.b16 %v808, %v806
          %v963 = vpack.c.b16 %v811, %v809
          %v964 = vpack.c.b16 %v812, %v810
          %v965 = vpack.c.b16 %v815, %v813
          %v966 = vpack.c.b16 %v816, %v814
          %v967 = vpack.c.b16 %v819, %v817
          %v968 = vpack.c.b16 %v820, %v818
          %v969 = vpack.c.b16 %v823, %v821
          %v970 = vpack.c.b16 %v824, %v822
          %v971 = vpack.c.b16 %v827, %v825
          %v972 = vpack.c.b16 %v828, %v826
          %v973 = vpack.c.b16 %v831, %v829
          %v974 = vpack.c.b16 %v832, %v830
          %v975 = vpack.c.b16 %v835, %v833
          %v976 = vpack.c.b16 %v836, %v834
          %v977 = vpack.c.b16 %v839, %v837
          %v978 = vpack.c.b16 %v840, %v838
          %v979 = vpack.c.b16 %v843, %v841
          %v980 = vpack.c.b16 %v844, %v842
          %v981 = vpack.c.b16 %v847, %v845
          %v982 = vpack.c.b16 %v848, %v846
          %v983 = vpack.c.b16 %v851, %v849
          %v984 = vpack.c.b16 %v852, %v850
          %v985 = vpack.c.b16 %v855, %v853
          %v986 = vpack.c.b16 %v856, %v854
          %v987 = vpack.c.b16 %v859, %v857
          %v988 = vpack.c.b16 %v860, %v858
          %v989 = vpack.c.b16 %v863, %v861
          %v990 = vpack.c.b16 %v864, %v862
          %v991 = vpack.c.b16 %v867, %v865
          %v992 = vpack.c.b16 %v868, %v866
          %v993 = vpack.c.b16 %v871, %v869
          %v994 = vpack.c.b16 %v872, %v870
          %v995 = vpack.c.b16 %v875, %v873
          %v996 = vpack.c.b16 %v876, %v874
          %v997 = vpack.c.b16 %v879, %v877
          %v998 = vpack.c.b16 %v880, %v878
          %v999 = vpack.c.b16 %v883, %v881
          %v1000 = vpack.c.b16 %v884, %v882
          %v1001 = vpack.c.b16 %v887, %v885
          %v1002 = vpack.c.b16 %v888, %v886
          %v1003 = vpack.c.b16 %v891, %v889
          %v1004 = vpack.c.b16 %v892, %v890
          %1117 = vmatprep.subr.bf16.mxu0 %v894
          %1118 = vmatpush1.bf16.msra.mxu0 %v893
          %1119 = vmatprep.subr.bf16.mxu0 %v896
          %1120 = vmatpush1.bf16.msra.mxu0 %v895
          %1121 = vmatprep.subr.bf16.mxu0 %v898
          %1122 = vmatpush1.bf16.msra.mxu0 %v897
          %1123 = vmatprep.subr.bf16.mxu0 %v900
          %1124 = vmatpush1.bf16.msra.mxu0 %v899
          %1125 = vmatprep.subr.bf16.mxu0 %v902
          %1126 = vmatpush1.bf16.msra.mxu0 %v901
          %1127 = vmatprep.subr.bf16.mxu0 %v904
          %1128 = vmatpush1.bf16.msra.mxu0 %v903
          %1129 = vmatprep.subr.bf16.mxu0 %v906
          %1130 = vmatpush1.bf16.msra.mxu0 %v905
          %1131 = vmatprep.subr.bf16.mxu0 %v908
          %1132 = vmatpush1.bf16.msra.mxu0 %v907
          %1133 = vmatprep.subr.bf16.mxu0 %v910
          %1134 = vmatpush1.bf16.msra.mxu0 %v909
          %1135 = vmatprep.subr.bf16.mxu0 %v912
          %1136 = vmatpush1.bf16.msra.mxu0 %v911
          %1137 = vmatprep.subr.bf16.mxu0 %v914
          %1138 = vmatpush1.bf16.msra.mxu0 %v913
          %1139 = vmatprep.subr.bf16.mxu0 %v916
          %1140 = vmatpush1.bf16.msra.mxu0 %v915
          %1141 = vmatprep.subr.bf16.mxu0 %v918
          %1142 = vmatpush1.bf16.msra.mxu0 %v917
          %1143 = vmatprep.subr.bf16.mxu0 %v920
          %1144 = vmatpush1.bf16.msra.mxu0 %v919
          %1145 = vmatprep.subr.bf16.mxu0 %v922
          %1146 = vmatpush1.bf16.msra.mxu0 %v921
          %1147 = vmatprep.subr.bf16.mxu0 %v924
          %1148 = vmatpush1.bf16.msra.mxu0 %v923
          %1149 = vmatprep.mubr.bf16.mxu0 %v427
          %1150 = vmatmul.mubr.bf16.gmra.mrb[0].mxu0 %v426
          %v1151 = vpop.f32.mrb[0].mxu0
          %v1152 = vadd.f32 %v550, %v1151
          %v1153 = vpop.f32.mrb[0].mxu0
          %v1154 = vadd.f32 %v554, %v1153
          %v1155 = vpop.f32.mrb[0].mxu0
          %v1156 = vpop.f32.mrb[0].mxu0
          %1157 = vdwg.mxu0
          %1158 = vmatprep.subr.bf16.mxu0 %v926
          %1159 = vmatpush1.bf16.msra.mxu0 %v925
          %1160 = vmatprep.subr.bf16.mxu0 %v928
          %1161 = vmatpush1.bf16.msra.mxu0 %v927
          %1162 = vmatprep.subr.bf16.mxu0 %v930
          %1163 = vmatpush1.bf16.msra.mxu0 %v929
          %1164 = vmatprep.subr.bf16.mxu0 %v932
          %1165 = vmatpush1.bf16.msra.mxu0 %v931
          %1166 = vmatprep.subr.bf16.mxu0 %v934
          %1167 = vmatpush1.bf16.msra.mxu0 %v933
          %1168 = vmatprep.subr.bf16.mxu0 %v936
          %1169 = vmatpush1.bf16.msra.mxu0 %v935
          %1170 = vmatprep.subr.bf16.mxu0 %v938
          %1171 = vmatpush1.bf16.msra.mxu0 %v937
          %1172 = vmatprep.subr.bf16.mxu0 %v940
          %1173 = vmatpush1.bf16.msra.mxu0 %v939
          %1174 = vmatprep.subr.bf16.mxu0 %v942
          %1175 = vmatpush1.bf16.msra.mxu0 %v941
          %1176 = vmatprep.subr.bf16.mxu0 %v944
          %1177 = vmatpush1.bf16.msra.mxu0 %v943
          %1178 = vmatprep.subr.bf16.mxu0 %v946
          %1179 = vmatpush1.bf16.msra.mxu0 %v945
          %1180 = vmatprep.subr.bf16.mxu0 %v948
          %1181 = vmatpush1.bf16.msra.mxu0 %v947
          %1182 = vmatprep.subr.bf16.mxu0 %v950
          %1183 = vmatpush1.bf16.msra.mxu0 %v949
          %1184 = vmatprep.subr.bf16.mxu0 %v952
          %1185 = vmatpush1.bf16.msra.mxu0 %v951
          %1186 = vmatprep.subr.bf16.mxu0 %v954
          %1187 = vmatpush1.bf16.msra.mxu0 %v953
          %1188 = vmatprep.subr.bf16.mxu0 %v956
          %1189 = vmatpush1.bf16.msra.mxu0 %v955
          %1190 = vmatprep.mubr.bf16.mxu0 %v429
          %1191 = vmatmul.mubr.bf16.gmra.mrb[0].mxu0 %v428
          %v1192 = vpop.f32.mrb[0].mxu0
          %v1193 = vadd.f32 %v1152, %v1192
          %v1194 = vpop.f32.mrb[0].mxu0
          %v1195 = vadd.f32 %v1154, %v1194
          %v1196 = vpop.f32.mrb[0].mxu0
          %v1197 = vpop.f32.mrb[0].mxu0
          %1198 = vdwg.mxu0
          %1199 = vmatprep.subr.bf16.mxu0 %v958
          %1200 = vmatpush1.bf16.msra.mxu0 %v957
          %1201 = vmatprep.subr.bf16.mxu0 %v960
          %1202 = vmatpush1.bf16.msra.mxu0 %v959
          %1203 = vmatprep.subr.bf16.mxu0 %v962
          %1204 = vmatpush1.bf16.msra.mxu0 %v961
          %1205 = vmatprep.subr.bf16.mxu0 %v964
          %1206 = vmatpush1.bf16.msra.mxu0 %v963
          %1207 = vmatprep.subr.bf16.mxu0 %v966
          %1208 = vmatpush1.bf16.msra.mxu0 %v965
          %1209 = vmatprep.subr.bf16.mxu0 %v968
          %1210 = vmatpush1.bf16.msra.mxu0 %v967
          %1211 = vmatprep.subr.bf16.mxu0 %v970
          %1212 = vmatpush1.bf16.msra.mxu0 %v969
          %1213 = vmatprep.subr.bf16.mxu0 %v972
          %1214 = vmatpush1.bf16.msra.mxu0 %v971
          %1215 = vmatprep.subr.bf16.mxu0 %v974
          %1216 = vmatpush1.bf16.msra.mxu0 %v973
          %1217 = vmatprep.subr.bf16.mxu0 %v976
          %1218 = vmatpush1.bf16.msra.mxu0 %v975
          %1219 = vmatprep.subr.bf16.mxu0 %v978
          %1220 = vmatpush1.bf16.msra.mxu0 %v977
          %1221 = vmatprep.subr.bf16.mxu0 %v980
          %1222 = vmatpush1.bf16.msra.mxu0 %v979
          %1223 = vmatprep.subr.bf16.mxu0 %v982
          %1224 = vmatpush1.bf16.msra.mxu0 %v981
          %1225 = vmatprep.subr.bf16.mxu0 %v984
          %1226 = vmatpush1.bf16.msra.mxu0 %v983
          %1227 = vmatprep.subr.bf16.mxu0 %v986
          %1228 = vmatpush1.bf16.msra.mxu0 %v985
          %1229 = vmatprep.subr.bf16.mxu0 %v988
          %1230 = vmatpush1.bf16.msra.mxu0 %v987
          %1231 = vmatprep.mubr.bf16.mxu0 %v431
          %1232 = vmatmul.mubr.bf16.gmra.mrb[0].mxu0 %v430
          %v1233 = vpop.f32.mrb[0].mxu0
          %v1234 = vadd.f32 %v1193, %v1233
          %v1235 = vpop.f32.mrb[0].mxu0
          %v1236 = vadd.f32 %v1195, %v1235
          %v1237 = vpop.f32.mrb[0].mxu0
          %v1238 = vpop.f32.mrb[0].mxu0
          %1239 = vdwg.mxu0
          %1240 = vmatprep.subr.bf16.mxu0 %v990
          %1241 = vmatpush1.bf16.msra.mxu0 %v989
          %1242 = vmatprep.subr.bf16.mxu0 %v992
          %1243 = vmatpush1.bf16.msra.mxu0 %v991
          %1244 = vmatprep.subr.bf16.mxu0 %v994
          %1245 = vmatpush1.bf16.msra.mxu0 %v993
          %1246 = vmatprep.subr.bf16.mxu0 %v996
          %1247 = vmatpush1.bf16.msra.mxu0 %v995
          %1248 = vmatprep.subr.bf16.mxu0 %v998
          %1249 = vmatpush1.bf16.msra.mxu0 %v997
          %1250 = vmatprep.subr.bf16.mxu0 %v1000
          %1251 = vmatpush1.bf16.msra.mxu0 %v999
          %1252 = vmatprep.subr.bf16.mxu0 %v1002
          %1253 = vmatpush1.bf16.msra.mxu0 %v1001
          %1254 = vmatprep.subr.bf16.mxu0 %v1004
          %1255 = vmatpush1.bf16.msra.mxu0 %v1003
          %1256 = vmatprep.subr.bf16.mxu0 0
          %1257 = vmatpush1.bf16.msra.mxu0 0
          %1258 = vmatprep.subr.bf16.mxu0 0
          %1259 = vmatpush1.bf16.msra.mxu0 0
          %1260 = vmatprep.subr.bf16.mxu0 0
          %1261 = vmatpush1.bf16.msra.mxu0 0
          %1262 = vmatprep.subr.bf16.mxu0 0
          %1263 = vmatpush1.bf16.msra.mxu0 0
          %1264 = vmatprep.subr.bf16.mxu0 0
          %1265 = vmatpush1.bf16.msra.mxu0 0
          %1266 = vmatprep.subr.bf16.mxu0 0
          %1267 = vmatpush1.bf16.msra.mxu0 0
          %1268 = vmatprep.subr.bf16.mxu0 0
          %1269 = vmatpush1.bf16.msra.mxu0 0
          %1270 = vmatprep.subr.bf16.mxu0 0
          %1271 = vmatpush1.bf16.msra.mxu0 0
          %1272 = vmatprep.mubr.bf16.mxu0 0
          %1273 = vmatmul.mubr.bf16.gmra.mrb[0].mxu0 %v432
          %v1274 = vpop.f32.mrb[0].mxu0
          %v1275 = vadd.f32 %v1234, %v1274
          %v1276 = vpop.f32.mrb[0].mxu0
          %v1277 = vadd.f32 %v1236, %v1276
          %v1278 = vpop.f32.mrb[0].mxu0
          %v1279 = vpop.f32.mrb[0].mxu0
          %1280 = vdwg.mxu0
          %v1281 = vmax.f32 %v1275, 0.0
          %v1282 = vmax.f32 %v1277, 0.0
          %v1283 = vpack.c.bf16 %v1281, %v1281
          %v1284 = vpack.c.bf16 %v1282, %v1282
          %v1285 = vld [vmem:[#allocation12] sm:$0xff]
          %v1286 = vld [vmem:[#allocation12 + $0x8] sm:$0xff]
          %v1287 = vld [vmem:[#allocation12 + $0x10] sm:$0xff]
          %v1288 = vld [vmem:[#allocation12 + $0x18] sm:$0xff]
          %v1289 = vld [vmem:[#allocation12 + $0x20] sm:$0xff]
          %v1290 = vld [vmem:[#allocation12 + $0x28] sm:$0xff]
          %v1291 = vld [vmem:[#allocation12 + $0x30] sm:$0xff]
          %v1292 = vld [vmem:[#allocation12 + $0x38] sm:$0xff]
          %v1293 = vld [vmem:[#allocation12 + $0x40] sm:$0xff]
          %v1294 = vld [vmem:[#allocation12 + $0x48] sm:$0xff]
          %v1295 = vld [vmem:[#allocation12 + $0x50] sm:$0xff]
          %v1296 = vld [vmem:[#allocation12 + $0x58] sm:$0xff]
          %v1297 = vld [vmem:[#allocation12 + $0x60] sm:$0xff]
          %v1298 = vld [vmem:[#allocation12 + $0x68] sm:$0xff]
          %v1299 = vld [vmem:[#allocation12 + $0x70] sm:$0xff]
          %v1300 = vld [vmem:[#allocation12 + $0x78] sm:$0xff]
          %v1301 = vld [vmem:[#allocation12 + $0x80] sm:$0xff]
          %v1302 = vld [vmem:[#allocation12 + $0x88] sm:$0xff]
          %v1303 = vld [vmem:[#allocation12 + $0x90] sm:$0xff]
          %v1304 = vld [vmem:[#allocation12 + $0x98] sm:$0xff]
          %v1305 = vld [vmem:[#allocation12 + $0xa0] sm:$0xff]
          %v1306 = vld [vmem:[#allocation12 + $0xa8] sm:$0xff]
          %v1307 = vld [vmem:[#allocation12 + $0xb0] sm:$0xff]
          %v1308 = vld [vmem:[#allocation12 + $0xb8] sm:$0xff]
          %v1309 = vld [vmem:[#allocation12 + $0xc0] sm:$0xff]
          %v1310 = vld [vmem:[#allocation12 + $0xc8] sm:$0xff]
          %v1311 = vld [vmem:[#allocation12 + $0xd0] sm:$0xff]
          %v1312 = vld [vmem:[#allocation12 + $0xd8] sm:$0xff]
          %v1313 = vld [vmem:[#allocation12 + $0xe0] sm:$0xff]
          %v1314 = vld [vmem:[#allocation12 + $0xe8] sm:$0xff]
          %v1315 = vld [vmem:[#allocation12 + $0xf0] sm:$0xff]
          %v1316 = vld [vmem:[#allocation12 + $0xf8] sm:$0xff]
          %v1317 = vld [vmem:[#allocation14] sm:$0x3]
          %v1319 = vlaneseq
          %v1320 = vshrl.u32 %v1319, 7
          %v1321 = vsub.s32 0, %v1320
          %v1322 = vrot.slane %v1317, %v1321
          %v1323 = vlaneseq
          %v1324 = vshrl.u32 %v1323, 7
          %v1325 = vsub.s32 1, %v1324
          %v1326 = vrot.slane %v1317, %v1325
          %v1361 = vunpack.c.l.b16 %v1285
          %v1362 = vunpack.c.h.b16 %v1285
          %v1363 = vunpack.c.l.b16 %v1286
          %v1364 = vunpack.c.h.b16 %v1286
          %v1365 = vunpack.c.l.b16 %v1287
          %v1366 = vunpack.c.h.b16 %v1287
          %v1367 = vunpack.c.l.b16 %v1288
          %v1368 = vunpack.c.h.b16 %v1288
          %v1369 = vunpack.c.l.b16 %v1289
          %v1370 = vunpack.c.h.b16 %v1289
          %v1371 = vunpack.c.l.b16 %v1290
          %v1372 = vunpack.c.h.b16 %v1290
          %v1373 = vunpack.c.l.b16 %v1291
          %v1374 = vunpack.c.h.b16 %v1291
          %v1375 = vunpack.c.l.b16 %v1292
          %v1376 = vunpack.c.h.b16 %v1292
          %v1377 = vunpack.c.l.b16 %v1293
          %v1378 = vunpack.c.h.b16 %v1293
          %v1379 = vunpack.c.l.b16 %v1294
          %v1380 = vunpack.c.h.b16 %v1294
          %v1381 = vunpack.c.l.b16 %v1295
          %v1382 = vunpack.c.h.b16 %v1295
          %v1383 = vunpack.c.l.b16 %v1296
          %v1384 = vunpack.c.h.b16 %v1296
          %v1385 = vunpack.c.l.b16 %v1297
          %v1386 = vunpack.c.h.b16 %v1297
          %v1387 = vunpack.c.l.b16 %v1298
          %v1388 = vunpack.c.h.b16 %v1298
          %v1389 = vunpack.c.l.b16 %v1299
          %v1390 = vunpack.c.h.b16 %v1299
          %v1391 = vunpack.c.l.b16 %v1300
          %v1392 = vunpack.c.h.b16 %v1300
          %v1393 = vunpack.c.l.b16 %v1301
          %v1394 = vunpack.c.h.b16 %v1301
          %v1395 = vunpack.c.l.b16 %v1302
          %v1396 = vunpack.c.h.b16 %v1302
          %v1397 = vunpack.c.l.b16 %v1303
          %v1398 = vunpack.c.h.b16 %v1303
          %v1399 = vunpack.c.l.b16 %v1304
          %v1400 = vunpack.c.h.b16 %v1304
          %v1401 = vunpack.c.l.b16 %v1305
          %v1402 = vunpack.c.h.b16 %v1305
          %v1403 = vunpack.c.l.b16 %v1306
          %v1404 = vunpack.c.h.b16 %v1306
          %v1405 = vunpack.c.l.b16 %v1307
          %v1406 = vunpack.c.h.b16 %v1307
          %v1407 = vunpack.c.l.b16 %v1308
          %v1408 = vunpack.c.h.b16 %v1308
          %v1409 = vunpack.c.l.b16 %v1309
          %v1410 = vunpack.c.h.b16 %v1309
          %v1411 = vunpack.c.l.b16 %v1310
          %v1412 = vunpack.c.h.b16 %v1310
          %v1413 = vunpack.c.l.b16 %v1311
          %v1414 = vunpack.c.h.b16 %v1311
          %v1415 = vunpack.c.l.b16 %v1312
          %v1416 = vunpack.c.h.b16 %v1312
          %v1417 = vunpack.c.l.b16 %v1313
          %v1418 = vunpack.c.h.b16 %v1313
          %v1419 = vunpack.c.l.b16 %v1314
          %v1420 = vunpack.c.h.b16 %v1314
          %v1421 = vunpack.c.l.b16 %v1315
          %v1422 = vunpack.c.h.b16 %v1315
          %v1423 = vunpack.c.l.b16 %v1316
          %v1424 = vunpack.c.h.b16 %v1316
          %v1425 = vpack.c.b16 %v1363, %v1361
          %v1426 = vpack.c.b16 %v1364, %v1362
          %v1427 = vpack.c.b16 %v1367, %v1365
          %v1428 = vpack.c.b16 %v1368, %v1366
          %v1429 = vpack.c.b16 %v1371, %v1369
          %v1430 = vpack.c.b16 %v1372, %v1370
          %v1431 = vpack.c.b16 %v1375, %v1373
          %v1432 = vpack.c.b16 %v1376, %v1374
          %v1433 = vpack.c.b16 %v1379, %v1377
          %v1434 = vpack.c.b16 %v1380, %v1378
          %v1435 = vpack.c.b16 %v1383, %v1381
          %v1436 = vpack.c.b16 %v1384, %v1382
          %v1437 = vpack.c.b16 %v1387, %v1385
          %v1438 = vpack.c.b16 %v1388, %v1386
          %v1439 = vpack.c.b16 %v1391, %v1389
          %v1440 = vpack.c.b16 %v1392, %v1390
          %v1441 = vpack.c.b16 %v1395, %v1393
          %v1442 = vpack.c.b16 %v1396, %v1394
          %v1443 = vpack.c.b16 %v1399, %v1397
          %v1444 = vpack.c.b16 %v1400, %v1398
          %v1445 = vpack.c.b16 %v1403, %v1401
          %v1446 = vpack.c.b16 %v1404, %v1402
          %v1447 = vpack.c.b16 %v1407, %v1405
          %v1448 = vpack.c.b16 %v1408, %v1406
          %v1449 = vpack.c.b16 %v1411, %v1409
          %v1450 = vpack.c.b16 %v1412, %v1410
          %v1451 = vpack.c.b16 %v1415, %v1413
          %v1452 = vpack.c.b16 %v1416, %v1414
          %v1453 = vpack.c.b16 %v1419, %v1417
          %v1454 = vpack.c.b16 %v1420, %v1418
          %v1455 = vpack.c.b16 %v1423, %v1421
          %v1456 = vpack.c.b16 %v1424, %v1422
          %1489 = vmatprep.subr.bf16.mxu0 %v1426
          %1490 = vmatpush1.bf16.msra.mxu0 %v1425
          %1491 = vmatprep.subr.bf16.mxu0 %v1428
          %1492 = vmatpush1.bf16.msra.mxu0 %v1427
          %1493 = vmatprep.subr.bf16.mxu0 %v1430
          %1494 = vmatpush1.bf16.msra.mxu0 %v1429
          %1495 = vmatprep.subr.bf16.mxu0 %v1432
          %1496 = vmatpush1.bf16.msra.mxu0 %v1431
          %1497 = vmatprep.subr.bf16.mxu0 %v1434
          %1498 = vmatpush1.bf16.msra.mxu0 %v1433
          %1499 = vmatprep.subr.bf16.mxu0 %v1436
          %1500 = vmatpush1.bf16.msra.mxu0 %v1435
          %1501 = vmatprep.subr.bf16.mxu0 %v1438
          %1502 = vmatpush1.bf16.msra.mxu0 %v1437
          %1503 = vmatprep.subr.bf16.mxu0 %v1440
          %1504 = vmatpush1.bf16.msra.mxu0 %v1439
          %1505 = vmatprep.subr.bf16.mxu0 %v1442
          %1506 = vmatpush1.bf16.msra.mxu0 %v1441
          %1507 = vmatprep.subr.bf16.mxu0 %v1444
          %1508 = vmatpush1.bf16.msra.mxu0 %v1443
          %1509 = vmatprep.subr.bf16.mxu0 %v1446
          %1510 = vmatpush1.bf16.msra.mxu0 %v1445
          %1511 = vmatprep.subr.bf16.mxu0 %v1448
          %1512 = vmatpush1.bf16.msra.mxu0 %v1447
          %1513 = vmatprep.subr.bf16.mxu0 %v1450
          %1514 = vmatpush1.bf16.msra.mxu0 %v1449
          %1515 = vmatprep.subr.bf16.mxu0 %v1452
          %1516 = vmatpush1.bf16.msra.mxu0 %v1451
          %1517 = vmatprep.subr.bf16.mxu0 %v1454
          %1518 = vmatpush1.bf16.msra.mxu0 %v1453
          %1519 = vmatprep.subr.bf16.mxu0 %v1456
          %1520 = vmatpush1.bf16.msra.mxu0 %v1455
          %1521 = vmatprep.mubr.bf16.mxu0 %v1284
          %1522 = vmatmul.mubr.bf16.gmra.mrb[0].mxu0 %v1283
          %v1523 = vpop.f32.mrb[0].mxu0
          %v1524 = vadd.f32 %v1322, %v1523
          %v1525 = vpop.f32.mrb[0].mxu0
          %v1526 = vadd.f32 %v1326, %v1525
          %v1527 = vpop.f32.mrb[0].mxu0
          %v1528 = vpop.f32.mrb[0].mxu0
          %1529 = vdwg.mxu0
          %v1530 = vmax.f32 %v1524, 0.0
          %v1531 = vmax.f32 %v1526, 0.0
          %v1532 = vpack.c.bf16 %v1530, %v1530
          %v1533 = vpack.c.bf16 %v1531, %v1531
          %v1536 = vunpack.c.l.b16 %v1532
          %v1537 = vunpack.c.l.b16 %v1533
          %v1538 = vpack.c.b16 %v1537, %v1536
          %1540 = vst [vmem:[#allocation2] sm:$0xff] %v1538
          %vm1541 = vcmask 7168
          %1542 = vst.msk [vmem:[#allocation4] sm:$0xff] %vm1541, -inf
          %1543 = vst.msk [vmem:[#allocation5] sm:$0xff] %vm1541, 0.0
        $region80: #{tpu_custom_call.1} parent=47 // pred_fallthru
          _
        %v1544 = vld [vmem:[#allocation2] sm:$0xff]
        %v1545 = vld [vmem:[%s372] sm:$0xff]
        %v1546 = vld [vmem:[%s372 + $0x8] sm:$0xff]
        %v1547 = vld [vmem:[%s372 + $0x10] sm:$0xff]
        %v1548 = vld [vmem:[%s372 + $0x18] sm:$0xff]
        %v1549 = vld [vmem:[%s372 + $0x20] sm:$0xff]
        %v1550 = vld [vmem:[%s372 + $0x28] sm:$0xff]
        %v1551 = vld [vmem:[%s372 + $0x30] sm:$0xff]
        %v1552 = vld [vmem:[%s372 + $0x38] sm:$0xff]
        %v1553 = vld [vmem:[%s372 + $0x40] sm:$0xff]
        %v1554 = vld [vmem:[%s372 + $0x48] sm:$0xff]
        %v1555 = vld [vmem:[%s372 + $0x50] sm:$0xff]
        %v1556 = vld [vmem:[%s372 + $0x58] sm:$0xff]
        %v1557 = vld [vmem:[%s372 + $0x60] sm:$0xff]
        %v1558 = vld [vmem:[%s372 + $0x68] sm:$0xff]
        %v1559 = vld [vmem:[%s372 + $0x70] sm:$0xff]
        %v1560 = vld [vmem:[%s372 + $0x78] sm:$0xff]
        %v1561 = vld [vmem:[%s372 + $0x80] sm:$0xff]
        %v1562 = vld [vmem:[%s372 + $0x88] sm:$0xff]
        %v1563 = vld [vmem:[%s372 + $0x90] sm:$0xff]
        %v1564 = vld [vmem:[%s372 + $0x98] sm:$0xff]
        %v1565 = vld [vmem:[%s372 + $0xa0] sm:$0xff]
        %v1566 = vld [vmem:[%s372 + $0xa8] sm:$0xff]
        %v1567 = vld [vmem:[%s372 + $0xb0] sm:$0xff]
        %v1568 = vld [vmem:[%s372 + $0xb8] sm:$0xff]
        %v1569 = vld [vmem:[%s372 + $0xc0] sm:$0xff]
        %v1570 = vld [vmem:[%s372 + $0xc8] sm:$0xff]
        %v1571 = vld [vmem:[%s372 + $0xd0] sm:$0xff]
        %v1572 = vld [vmem:[%s372 + $0xd8] sm:$0xff]
        %v1573 = vld [vmem:[%s372 + $0xe0] sm:$0xff]
        %v1574 = vld [vmem:[%s372 + $0xe8] sm:$0xff]
        %v1575 = vld [vmem:[%s372 + $0xf0] sm:$0xff]
        %v1576 = vld [vmem:[%s372 + $0xf8] sm:$0xff]
        %v1577 = vld [vmem:[%s372 + $0x100] sm:$0xff]
        %v1578 = vld [vmem:[%s372 + $0x108] sm:$0xff]
        %v1579 = vld [vmem:[%s372 + $0x110] sm:$0xff]
        %v1580 = vld [vmem:[%s372 + $0x118] sm:$0xff]
        %v1581 = vld [vmem:[%s372 + $0x120] sm:$0xff]
        %v1582 = vld [vmem:[%s372 + $0x128] sm:$0xff]
        %v1583 = vld [vmem:[%s372 + $0x130] sm:$0xff]
        %v1584 = vld [vmem:[%s372 + $0x138] sm:$0xff]
        %v1585 = vld [vmem:[%s372 + $0x140] sm:$0xff]
        %v1586 = vld [vmem:[%s372 + $0x148] sm:$0xff]
        %v1587 = vld [vmem:[%s372 + $0x150] sm:$0xff]
        %v1588 = vld [vmem:[%s372 + $0x158] sm:$0xff]
        %v1589 = vld [vmem:[%s372 + $0x160] sm:$0xff]
        %v1590 = vld [vmem:[%s372 + $0x168] sm:$0xff]
        %v1591 = vld [vmem:[%s372 + $0x170] sm:$0xff]
        %v1592 = vld [vmem:[%s372 + $0x178] sm:$0xff]
        %v1593 = vld [vmem:[%s372 + $0x180] sm:$0xff]
        %v1594 = vld [vmem:[%s372 + $0x188] sm:$0xff]
        %v1595 = vld [vmem:[%s372 + $0x190] sm:$0xff]
        %v1596 = vld [vmem:[%s372 + $0x198] sm:$0xff]
        %v1597 = vld [vmem:[%s372 + $0x1a0] sm:$0xff]
        %v1598 = vld [vmem:[%s372 + $0x1a8] sm:$0xff]
        %v1599 = vld [vmem:[%s372 + $0x1b0] sm:$0xff]
        %v1600 = vld [vmem:[%s372 + $0x1b8] sm:$0xff]
        %v1601 = vld [vmem:[%s372 + $0x1c0] sm:$0xff]
        %v1602 = vld [vmem:[%s372 + $0x1c8] sm:$0xff]
        %v1603 = vld [vmem:[%s372 + $0x1d0] sm:$0xff]
        %v1604 = vld [vmem:[%s372 + $0x1d8] sm:$0xff]
        %v1605 = vld [vmem:[%s372 + $0x1e0] sm:$0xff]
        %v1606 = vld [vmem:[%s372 + $0x1e8] sm:$0xff]
        %v1607 = vld [vmem:[%s372 + $0x1f0] sm:$0xff]
        %v1608 = vld [vmem:[%s372 + $0x1f8] sm:$0xff]
        %v1609 = vld [vmem:[%s372 + $0x200] sm:$0xff]
        %v1610 = vld [vmem:[%s372 + $0x208] sm:$0xff]
        %v1611 = vld [vmem:[%s372 + $0x210] sm:$0xff]
        %v1612 = vld [vmem:[%s372 + $0x218] sm:$0xff]
        %v1613 = vld [vmem:[%s372 + $0x220] sm:$0xff]
        %v1614 = vld [vmem:[%s372 + $0x228] sm:$0xff]
        %v1615 = vld [vmem:[%s372 + $0x230] sm:$0xff]
        %v1616 = vld [vmem:[%s372 + $0x238] sm:$0xff]
        %v1617 = vld [vmem:[%s372 + $0x240] sm:$0xff]
        %v1618 = vld [vmem:[%s372 + $0x248] sm:$0xff]
        %v1619 = vld [vmem:[%s372 + $0x250] sm:$0xff]
        %v1620 = vld [vmem:[%s372 + $0x258] sm:$0xff]
        %v1621 = vld [vmem:[%s372 + $0x260] sm:$0xff]
        %v1622 = vld [vmem:[%s372 + $0x268] sm:$0xff]
        %v1623 = vld [vmem:[%s372 + $0x270] sm:$0xff]
        %v1624 = vld [vmem:[%s372 + $0x278] sm:$0xff]
        %v1625 = vld [vmem:[%s372 + $0x280] sm:$0xff]
        %v1626 = vld [vmem:[%s372 + $0x288] sm:$0xff]
        %v1627 = vld [vmem:[%s372 + $0x290] sm:$0xff]
        %v1628 = vld [vmem:[%s372 + $0x298] sm:$0xff]
        %v1629 = vld [vmem:[%s372 + $0x2a0] sm:$0xff]
        %v1630 = vld [vmem:[%s372 + $0x2a8] sm:$0xff]
        %v1631 = vld [vmem:[%s372 + $0x2b0] sm:$0xff]
        %v1632 = vld [vmem:[%s372 + $0x2b8] sm:$0xff]
        %v1633 = vld [vmem:[%s372 + $0x2c0] sm:$0xff]
        %v1634 = vld [vmem:[%s372 + $0x2c8] sm:$0xff]
        %v1635 = vld [vmem:[%s372 + $0x2d0] sm:$0xff]
        %v1636 = vld [vmem:[%s372 + $0x2d8] sm:$0xff]
        %v1637 = vld [vmem:[%s372 + $0x2e0] sm:$0xff]
        %v1638 = vld [vmem:[%s372 + $0x2e8] sm:$0xff]
        %v1639 = vld [vmem:[%s372 + $0x2f0] sm:$0xff]
        %v1640 = vld [vmem:[%s372 + $0x2f8] sm:$0xff]
        %v1641 = vld [vmem:[%s372 + $0x300] sm:$0xff]
        %v1642 = vld [vmem:[%s372 + $0x308] sm:$0xff]
        %v1643 = vld [vmem:[%s372 + $0x310] sm:$0xff]
        %v1644 = vld [vmem:[%s372 + $0x318] sm:$0xff]
        %v1645 = vld [vmem:[%s372 + $0x320] sm:$0xff]
        %v1646 = vld [vmem:[%s372 + $0x328] sm:$0xff]
        %v1647 = vld [vmem:[%s372 + $0x330] sm:$0xff]
        %v1648 = vld [vmem:[%s372 + $0x338] sm:$0xff]
        %v1649 = vld [vmem:[%s372 + $0x340] sm:$0xff]
        %v1650 = vld [vmem:[%s372 + $0x348] sm:$0xff]
        %v1651 = vld [vmem:[%s372 + $0x350] sm:$0xff]
        %v1652 = vld [vmem:[%s372 + $0x358] sm:$0xff]
        %v1653 = vld [vmem:[%s372 + $0x360] sm:$0xff]
        %v1654 = vld [vmem:[%s372 + $0x368] sm:$0xff]
        %v1655 = vld [vmem:[%s372 + $0x370] sm:$0xff]
        %v1656 = vld [vmem:[%s372 + $0x378] sm:$0xff]
        %v1657 = vld [vmem:[%s372 + $0x380] sm:$0xff]
        %v1658 = vld [vmem:[%s372 + $0x388] sm:$0xff]
        %v1659 = vld [vmem:[%s372 + $0x390] sm:$0xff]
        %v1660 = vld [vmem:[%s372 + $0x398] sm:$0xff]
        %v1661 = vld [vmem:[%s372 + $0x3a0] sm:$0xff]
        %v1662 = vld [vmem:[%s372 + $0x3a8] sm:$0xff]
        %v1663 = vld [vmem:[%s372 + $0x3b0] sm:$0xff]
        %v1664 = vld [vmem:[%s372 + $0x3b8] sm:$0xff]
        %v1665 = vld [vmem:[%s372 + $0x3c0] sm:$0xff]
        %v1666 = vld [vmem:[%s372 + $0x3c8] sm:$0xff]
        %v1667 = vld [vmem:[%s372 + $0x3d0] sm:$0xff]
        %v1668 = vld [vmem:[%s372 + $0x3d8] sm:$0xff]
        %v1669 = vld [vmem:[%s372 + $0x3e0] sm:$0xff]
        %v1670 = vld [vmem:[%s372 + $0x3e8] sm:$0xff]
        %v1671 = vld [vmem:[%s372 + $0x3f0] sm:$0xff]
        %v1672 = vld [vmem:[%s372 + $0x3f8] sm:$0xff]
        %v1673 = vld [vmem:[%s372 + $0x400] sm:$0xff]
        %v1674 = vld [vmem:[%s372 + $0x408] sm:$0xff]
        %v1675 = vld [vmem:[%s372 + $0x410] sm:$0xff]
        %v1676 = vld [vmem:[%s372 + $0x418] sm:$0xff]
        %v1677 = vld [vmem:[%s372 + $0x420] sm:$0xff]
        %v1678 = vld [vmem:[%s372 + $0x428] sm:$0xff]
        %v1679 = vld [vmem:[%s372 + $0x430] sm:$0xff]
        %v1680 = vld [vmem:[%s372 + $0x438] sm:$0xff]
        %v1681 = vld [vmem:[%s372 + $0x440] sm:$0xff]
        %v1682 = vld [vmem:[%s372 + $0x448] sm:$0xff]
        %v1683 = vld [vmem:[%s372 + $0x450] sm:$0xff]
        %v1684 = vld [vmem:[%s372 + $0x458] sm:$0xff]
        %v1685 = vld [vmem:[%s372 + $0x460] sm:$0xff]
        %v1686 = vld [vmem:[%s372 + $0x468] sm:$0xff]
        %v1687 = vld [vmem:[%s372 + $0x470] sm:$0xff]
        %v1688 = vld [vmem:[%s372 + $0x478] sm:$0xff]
        %v1689 = vld [vmem:[%s372 + $0x480] sm:$0xff]
        %v1690 = vld [vmem:[%s372 + $0x488] sm:$0xff]
        %v1691 = vld [vmem:[%s372 + $0x490] sm:$0xff]
        %v1692 = vld [vmem:[%s372 + $0x498] sm:$0xff]
        %v1693 = vld [vmem:[%s372 + $0x4a0] sm:$0xff]
        %v1694 = vld [vmem:[%s372 + $0x4a8] sm:$0xff]
        %v1695 = vld [vmem:[%s372 + $0x4b0] sm:$0xff]
        %v1696 = vld [vmem:[%s372 + $0x4b8] sm:$0xff]
        %v1697 = vld [vmem:[%s372 + $0x4c0] sm:$0xff]
        %v1698 = vld [vmem:[%s372 + $0x4c8] sm:$0xff]
        %v1699 = vld [vmem:[%s372 + $0x4d0] sm:$0xff]
        %v1700 = vld [vmem:[%s372 + $0x4d8] sm:$0xff]
        %v1701 = vld [vmem:[%s372 + $0x4e0] sm:$0xff]
        %v1702 = vld [vmem:[%s372 + $0x4e8] sm:$0xff]
        %v1703 = vld [vmem:[%s372 + $0x4f0] sm:$0xff]
        %v1704 = vld [vmem:[%s372 + $0x4f8] sm:$0xff]
        %v1705 = vld [vmem:[%s381] sm:$0xff]
        %v1706 = vld [vmem:[%s381 + $0x8] sm:$0x3]
        %v1709 = vlaneseq
        %v1710 = vshrl.u32 %v1709, 7
        %v1711 = vsub.s32 0, %v1710
        %v1712 = vrot.slane %v1705, %v1711
        %v1713 = vlaneseq
        %v1714 = vshrl.u32 %v1713, 7
        %v1715 = vsub.s32 1, %v1714
        %v1716 = vrot.slane %v1705, %v1715
        %v1717 = vlaneseq
        %v1718 = vshrl.u32 %v1717, 7
        %v1719 = vsub.s32 2, %v1718
        %v1720 = vrot.slane %v1705, %v1719
        %v1721 = vlaneseq
        %v1722 = vshrl.u32 %v1721, 7
        %v1723 = vsub.s32 3, %v1722
        %v1724 = vrot.slane %v1705, %v1723
        %v1725 = vlaneseq
        %v1726 = vshrl.u32 %v1725, 7
        %v1727 = vsub.s32 4, %v1726
        %v1728 = vrot.slane %v1705, %v1727
        %v1729 = vlaneseq
        %v1730 = vshrl.u32 %v1729, 7
        %v1731 = vsub.s32 5, %v1730
        %v1732 = vrot.slane %v1705, %v1731
        %v1733 = vlaneseq
        %v1734 = vshrl.u32 %v1733, 7
        %v1735 = vsub.s32 6, %v1734
        %v1736 = vrot.slane %v1705, %v1735
        %v1737 = vlaneseq
        %v1738 = vshrl.u32 %v1737, 7
        %v1739 = vsub.s32 7, %v1738
        %v1740 = vrot.slane %v1705, %v1739
        %v1741 = vlaneseq
        %v1742 = vshrl.u32 %v1741, 7
        %v1743 = vsub.s32 0, %v1742
        %v1744 = vrot.slane %v1706, %v1743
        %v1745 = vlaneseq
        %v1746 = vshrl.u32 %v1745, 7
        %v1747 = vsub.s32 1, %v1746
        %v1748 = vrot.slane %v1706, %v1747
        %v1760 = vunpack.c.l.b16 %v1544
        %v1761 = vunpack.c.h.b16 %v1544
        %v1762 = vpack.c.b16 %v1760, %v1760
        %v1763 = vpack.c.b16 %v1761, %v1761
        %v1926 = vunpack.c.l.b16 %v1545
        %v1927 = vunpack.c.h.b16 %v1545
        %v1928 = vunpack.c.l.b16 %v1546
        %v1929 = vunpack.c.h.b16 %v1546
        %v1930 = vunpack.c.l.b16 %v1547
        %v1931 = vunpack.c.h.b16 %v1547
        %v1932 = vunpack.c.l.b16 %v1548
        %v1933 = vunpack.c.h.b16 %v1548
        %v1934 = vunpack.c.l.b16 %v1549
        %v1935 = vunpack.c.h.b16 %v1549
        %v1936 = vunpack.c.l.b16 %v1550
        %v1937 = vunpack.c.h.b16 %v1550
        %v1938 = vunpack.c.l.b16 %v1551
        %v1939 = vunpack.c.h.b16 %v1551
        %v1940 = vunpack.c.l.b16 %v1552
        %v1941 = vunpack.c.h.b16 %v1552
        %v1942 = vunpack.c.l.b16 %v1553
        %v1943 = vunpack.c.h.b16 %v1553
        %v1944 = vunpack.c.l.b16 %v1554
        %v1945 = vunpack.c.h.b16 %v1554
        %v1946 = vunpack.c.l.b16 %v1555
        %v1947 = vunpack.c.h.b16 %v1555
        %v1948 = vunpack.c.l.b16 %v1556
        %v1949 = vunpack.c.h.b16 %v1556
        %v1950 = vunpack.c.l.b16 %v1557
        %v1951 = vunpack.c.h.b16 %v1557
        %v1952 = vunpack.c.l.b16 %v1558
        %v1953 = vunpack.c.h.b16 %v1558
        %v1954 = vunpack.c.l.b16 %v1559
        %v1955 = vunpack.c.h.b16 %v1559
        %v1956 = vunpack.c.l.b16 %v1560
        %v1957 = vunpack.c.h.b16 %v1560
        %v1958 = vunpack.c.l.b16 %v1561
        %v1959 = vunpack.c.h.b16 %v1561
        %v1960 = vunpack.c.l.b16 %v1562
        %v1961 = vunpack.c.h.b16 %v1562
        %v1962 = vunpack.c.l.b16 %v1563
        %v1963 = vunpack.c.h.b16 %v1563
        %v1964 = vunpack.c.l.b16 %v1564
        %v1965 = vunpack.c.h.b16 %v1564
        %v1966 = vunpack.c.l.b16 %v1565
        %v1967 = vunpack.c.h.b16 %v1565
        %v1968 = vunpack.c.l.b16 %v1566
        %v1969 = vunpack.c.h.b16 %v1566
        %v1970 = vunpack.c.l.b16 %v1567
        %v1971 = vunpack.c.h.b16 %v1567
        %v1972 = vunpack.c.l.b16 %v1568
        %v1973 = vunpack.c.h.b16 %v1568
        %v1974 = vunpack.c.l.b16 %v1569
        %v1975 = vunpack.c.h.b16 %v1569
        %v1976 = vunpack.c.l.b16 %v1570
        %v1977 = vunpack.c.h.b16 %v1570
        %v1978 = vunpack.c.l.b16 %v1571
        %v1979 = vunpack.c.h.b16 %v1571
        %v1980 = vunpack.c.l.b16 %v1572
        %v1981 = vunpack.c.h.b16 %v1572
        %v1982 = vunpack.c.l.b16 %v1573
        %v1983 = vunpack.c.h.b16 %v1573
        %v1984 = vunpack.c.l.b16 %v1574
        %v1985 = vunpack.c.h.b16 %v1574
        %v1986 = vunpack.c.l.b16 %v1575
        %v1987 = vunpack.c.h.b16 %v1575
        %v1988 = vunpack.c.l.b16 %v1576
        %v1989 = vunpack.c.h.b16 %v1576
        %v1990 = vunpack.c.l.b16 %v1577
        %v1991 = vunpack.c.h.b16 %v1577
        %v1992 = vunpack.c.l.b16 %v1578
        %v1993 = vunpack.c.h.b16 %v1578
        %v1994 = vunpack.c.l.b16 %v1579
        %v1995 = vunpack.c.h.b16 %v1579
        %v1996 = vunpack.c.l.b16 %v1580
        %v1997 = vunpack.c.h.b16 %v1580
        %v1998 = vunpack.c.l.b16 %v1581
        %v1999 = vunpack.c.h.b16 %v1581
        %v2000 = vunpack.c.l.b16 %v1582
        %v2001 = vunpack.c.h.b16 %v1582
        %v2002 = vunpack.c.l.b16 %v1583
        %v2003 = vunpack.c.h.b16 %v1583
        %v2004 = vunpack.c.l.b16 %v1584
        %v2005 = vunpack.c.h.b16 %v1584
        %v2006 = vunpack.c.l.b16 %v1585
        %v2007 = vunpack.c.h.b16 %v1585
        %v2008 = vunpack.c.l.b16 %v1586
        %v2009 = vunpack.c.h.b16 %v1586
        %v2010 = vunpack.c.l.b16 %v1587
        %v2011 = vunpack.c.h.b16 %v1587
        %v2012 = vunpack.c.l.b16 %v1588
        %v2013 = vunpack.c.h.b16 %v1588
        %v2014 = vunpack.c.l.b16 %v1589
        %v2015 = vunpack.c.h.b16 %v1589
        %v2016 = vunpack.c.l.b16 %v1590
        %v2017 = vunpack.c.h.b16 %v1590
        %v2018 = vunpack.c.l.b16 %v1591
        %v2019 = vunpack.c.h.b16 %v1591
        %v2020 = vunpack.c.l.b16 %v1592
        %v2021 = vunpack.c.h.b16 %v1592
        %v2022 = vunpack.c.l.b16 %v1593
        %v2023 = vunpack.c.h.b16 %v1593
        %v2024 = vunpack.c.l.b16 %v1594
        %v2025 = vunpack.c.h.b16 %v1594
        %v2026 = vunpack.c.l.b16 %v1595
        %v2027 = vunpack.c.h.b16 %v1595
        %v2028 = vunpack.c.l.b16 %v1596
        %v2029 = vunpack.c.h.b16 %v1596
        %v2030 = vunpack.c.l.b16 %v1597
        %v2031 = vunpack.c.h.b16 %v1597
        %v2032 = vunpack.c.l.b16 %v1598
        %v2033 = vunpack.c.h.b16 %v1598
        %v2034 = vunpack.c.l.b16 %v1599
        %v2035 = vunpack.c.h.b16 %v1599
        %v2036 = vunpack.c.l.b16 %v1600
        %v2037 = vunpack.c.h.b16 %v1600
        %v2038 = vunpack.c.l.b16 %v1601
        %v2039 = vunpack.c.h.b16 %v1601
        %v2040 = vunpack.c.l.b16 %v1602
        %v2041 = vunpack.c.h.b16 %v1602
        %v2042 = vunpack.c.l.b16 %v1603
        %v2043 = vunpack.c.h.b16 %v1603
        %v2044 = vunpack.c.l.b16 %v1604
        %v2045 = vunpack.c.h.b16 %v1604
        %v2046 = vunpack.c.l.b16 %v1605
        %v2047 = vunpack.c.h.b16 %v1605
        %v2048 = vunpack.c.l.b16 %v1606
        %v2049 = vunpack.c.h.b16 %v1606
        %v2050 = vunpack.c.l.b16 %v1607
        %v2051 = vunpack.c.h.b16 %v1607
        %v2052 = vunpack.c.l.b16 %v1608
        %v2053 = vunpack.c.h.b16 %v1608
        %v2054 = vunpack.c.l.b16 %v1609
        %v2055 = vunpack.c.h.b16 %v1609
        %v2056 = vunpack.c.l.b16 %v1610
        %v2057 = vunpack.c.h.b16 %v1610
        %v2058 = vunpack.c.l.b16 %v1611
        %v2059 = vunpack.c.h.b16 %v1611
        %v2060 = vunpack.c.l.b16 %v1612
        %v2061 = vunpack.c.h.b16 %v1612
        %v2062 = vunpack.c.l.b16 %v1613
        %v2063 = vunpack.c.h.b16 %v1613
        %v2064 = vunpack.c.l.b16 %v1614
        %v2065 = vunpack.c.h.b16 %v1614
        %v2066 = vunpack.c.l.b16 %v1615
        %v2067 = vunpack.c.h.b16 %v1615
        %v2068 = vunpack.c.l.b16 %v1616
        %v2069 = vunpack.c.h.b16 %v1616
        %v2070 = vunpack.c.l.b16 %v1617
        %v2071 = vunpack.c.h.b16 %v1617
        %v2072 = vunpack.c.l.b16 %v1618
        %v2073 = vunpack.c.h.b16 %v1618
        %v2074 = vunpack.c.l.b16 %v1619
        %v2075 = vunpack.c.h.b16 %v1619
        %v2076 = vunpack.c.l.b16 %v1620
        %v2077 = vunpack.c.h.b16 %v1620
        %v2078 = vunpack.c.l.b16 %v1621
        %v2079 = vunpack.c.h.b16 %v1621
        %v2080 = vunpack.c.l.b16 %v1622
        %v2081 = vunpack.c.h.b16 %v1622
        %v2082 = vunpack.c.l.b16 %v1623
        %v2083 = vunpack.c.h.b16 %v1623
        %v2084 = vunpack.c.l.b16 %v1624
        %v2085 = vunpack.c.h.b16 %v1624
        %v2086 = vunpack.c.l.b16 %v1625
        %v2087 = vunpack.c.h.b16 %v1625
        %v2088 = vunpack.c.l.b16 %v1626
        %v2089 = vunpack.c.h.b16 %v1626
        %v2090 = vunpack.c.l.b16 %v1627
        %v2091 = vunpack.c.h.b16 %v1627
        %v2092 = vunpack.c.l.b16 %v1628
        %v2093 = vunpack.c.h.b16 %v1628
        %v2094 = vunpack.c.l.b16 %v1629
        %v2095 = vunpack.c.h.b16 %v1629
        %v2096 = vunpack.c.l.b16 %v1630
        %v2097 = vunpack.c.h.b16 %v1630
        %v2098 = vunpack.c.l.b16 %v1631
        %v2099 = vunpack.c.h.b16 %v1631
        %v2100 = vunpack.c.l.b16 %v1632
        %v2101 = vunpack.c.h.b16 %v1632
        %v2102 = vunpack.c.l.b16 %v1633
        %v2103 = vunpack.c.h.b16 %v1633
        %v2104 = vunpack.c.l.b16 %v1634
        %v2105 = vunpack.c.h.b16 %v1634
        %v2106 = vunpack.c.l.b16 %v1635
        %v2107 = vunpack.c.h.b16 %v1635
        %v2108 = vunpack.c.l.b16 %v1636
        %v2109 = vunpack.c.h.b16 %v1636
        %v2110 = vunpack.c.l.b16 %v1637
        %v2111 = vunpack.c.h.b16 %v1637
        %v2112 = vunpack.c.l.b16 %v1638
        %v2113 = vunpack.c.h.b16 %v1638
        %v2114 = vunpack.c.l.b16 %v1639
        %v2115 = vunpack.c.h.b16 %v1639
        %v2116 = vunpack.c.l.b16 %v1640
        %v2117 = vunpack.c.h.b16 %v1640
        %v2118 = vunpack.c.l.b16 %v1641
        %v2119 = vunpack.c.h.b16 %v1641
        %v2120 = vunpack.c.l.b16 %v1642
        %v2121 = vunpack.c.h.b16 %v1642
        %v2122 = vunpack.c.l.b16 %v1643
        %v2123 = vunpack.c.h.b16 %v1643
        %v2124 = vunpack.c.l.b16 %v1644
        %v2125 = vunpack.c.h.b16 %v1644
        %v2126 = vunpack.c.l.b16 %v1645
        %v2127 = vunpack.c.h.b16 %v1645
        %v2128 = vunpack.c.l.b16 %v1646
        %v2129 = vunpack.c.h.b16 %v1646
        %v2130 = vunpack.c.l.b16 %v1647
        %v2131 = vunpack.c.h.b16 %v1647
        %v2132 = vunpack.c.l.b16 %v1648
        %v2133 = vunpack.c.h.b16 %v1648
        %v2134 = vunpack.c.l.b16 %v1649
        %v2135 = vunpack.c.h.b16 %v1649
        %v2136 = vunpack.c.l.b16 %v1650
        %v2137 = vunpack.c.h.b16 %v1650
        %v2138 = vunpack.c.l.b16 %v1651
        %v2139 = vunpack.c.h.b16 %v1651
        %v2140 = vunpack.c.l.b16 %v1652
        %v2141 = vunpack.c.h.b16 %v1652
        %v2142 = vunpack.c.l.b16 %v1653
        %v2143 = vunpack.c.h.b16 %v1653
        %v2144 = vunpack.c.l.b16 %v1654
        %v2145 = vunpack.c.h.b16 %v1654
        %v2146 = vunpack.c.l.b16 %v1655
        %v2147 = vunpack.c.h.b16 %v1655
        %v2148 = vunpack.c.l.b16 %v1656
        %v2149 = vunpack.c.h.b16 %v1656
        %v2150 = vunpack.c.l.b16 %v1657
        %v2151 = vunpack.c.h.b16 %v1657
        %v2152 = vunpack.c.l.b16 %v1658
        %v2153 = vunpack.c.h.b16 %v1658
        %v2154 = vunpack.c.l.b16 %v1659
        %v2155 = vunpack.c.h.b16 %v1659
        %v2156 = vunpack.c.l.b16 %v1660
        %v2157 = vunpack.c.h.b16 %v1660
        %v2158 = vunpack.c.l.b16 %v1661
        %v2159 = vunpack.c.h.b16 %v1661
        %v2160 = vunpack.c.l.b16 %v1662
        %v2161 = vunpack.c.h.b16 %v1662
        %v2162 = vunpack.c.l.b16 %v1663
        %v2163 = vunpack.c.h.b16 %v1663
        %v2164 = vunpack.c.l.b16 %v1664
        %v2165 = vunpack.c.h.b16 %v1664
        %v2166 = vunpack.c.l.b16 %v1665
        %v2167 = vunpack.c.h.b16 %v1665
        %v2168 = vunpack.c.l.b16 %v1666
        %v2169 = vunpack.c.h.b16 %v1666
        %v2170 = vunpack.c.l.b16 %v1667
        %v2171 = vunpack.c.h.b16 %v1667
        %v2172 = vunpack.c.l.b16 %v1668
        %v2173 = vunpack.c.h.b16 %v1668
        %v2174 = vunpack.c.l.b16 %v1669
        %v2175 = vunpack.c.h.b16 %v1669
        %v2176 = vunpack.c.l.b16 %v1670
        %v2177 = vunpack.c.h.b16 %v1670
        %v2178 = vunpack.c.l.b16 %v1671
        %v2179 = vunpack.c.h.b16 %v1671
        %v2180 = vunpack.c.l.b16 %v1672
        %v2181 = vunpack.c.h.b16 %v1672
        %v2182 = vunpack.c.l.b16 %v1673
        %v2183 = vunpack.c.h.b16 %v1673
        %v2184 = vunpack.c.l.b16 %v1674
        %v2185 = vunpack.c.h.b16 %v1674
        %v2186 = vunpack.c.l.b16 %v1675
        %v2187 = vunpack.c.h.b16 %v1675
        %v2188 = vunpack.c.l.b16 %v1676
        %v2189 = vunpack.c.h.b16 %v1676
        %v2190 = vunpack.c.l.b16 %v1677
        %v2191 = vunpack.c.h.b16 %v1677
        %v2192 = vunpack.c.l.b16 %v1678
        %v2193 = vunpack.c.h.b16 %v1678
        %v2194 = vunpack.c.l.b16 %v1679
        %v2195 = vunpack.c.h.b16 %v1679
        %v2196 = vunpack.c.l.b16 %v1680
        %v2197 = vunpack.c.h.b16 %v1680
        %v2198 = vunpack.c.l.b16 %v1681
        %v2199 = vunpack.c.h.b16 %v1681
        %v2200 = vunpack.c.l.b16 %v1682
        %v2201 = vunpack.c.h.b16 %v1682
        %v2202 = vunpack.c.l.b16 %v1683
        %v2203 = vunpack.c.h.b16 %v1683
        %v2204 = vunpack.c.l.b16 %v1684
        %v2205 = vunpack.c.h.b16 %v1684
        %v2206 = vunpack.c.l.b16 %v1685
        %v2207 = vunpack.c.h.b16 %v1685
        %v2208 = vunpack.c.l.b16 %v1686
        %v2209 = vunpack.c.h.b16 %v1686
        %v2210 = vunpack.c.l.b16 %v1687
        %v2211 = vunpack.c.h.b16 %v1687
        %v2212 = vunpack.c.l.b16 %v1688
        %v2213 = vunpack.c.h.b16 %v1688
        %v2214 = vunpack.c.l.b16 %v1689
        %v2215 = vunpack.c.h.b16 %v1689
        %v2216 = vunpack.c.l.b16 %v1690
        %v2217 = vunpack.c.h.b16 %v1690
        %v2218 = vunpack.c.l.b16 %v1691
        %v2219 = vunpack.c.h.b16 %v1691
        %v2220 = vunpack.c.l.b16 %v1692
        %v2221 = vunpack.c.h.b16 %v1692
        %v2222 = vunpack.c.l.b16 %v1693
        %v2223 = vunpack.c.h.b16 %v1693
        %v2224 = vunpack.c.l.b16 %v1694
        %v2225 = vunpack.c.h.b16 %v1694
        %v2226 = vunpack.c.l.b16 %v1695
        %v2227 = vunpack.c.h.b16 %v1695
        %v2228 = vunpack.c.l.b16 %v1696
        %v2229 = vunpack.c.h.b16 %v1696
        %v2230 = vunpack.c.l.b16 %v1697
        %v2231 = vunpack.c.h.b16 %v1697
        %v2232 = vunpack.c.l.b16 %v1698
        %v2233 = vunpack.c.h.b16 %v1698
        %v2234 = vunpack.c.l.b16 %v1699
        %v2235 = vunpack.c.h.b16 %v1699
        %v2236 = vunpack.c.l.b16 %v1700
        %v2237 = vunpack.c.h.b16 %v1700
        %v2238 = vunpack.c.l.b16 %v1701
        %v2239 = vunpack.c.h.b16 %v1701
        %v2240 = vunpack.c.l.b16 %v1702
        %v2241 = vunpack.c.h.b16 %v1702
        %v2242 = vunpack.c.l.b16 %v1703
        %v2243 = vunpack.c.h.b16 %v1703
        %v2244 = vunpack.c.l.b16 %v1704
        %v2245 = vunpack.c.h.b16 %v1704
        %v2246 = vpack.c.b16 %v1936, %v1926
        %v2247 = vpack.c.b16 %v1937, %v1927
        %v2248 = vpack.c.b16 %v1938, %v1928
        %v2249 = vpack.c.b16 %v1939, %v1929
        %v2250 = vpack.c.b16 %v1940, %v1930
        %v2251 = vpack.c.b16 %v1941, %v1931
        %v2252 = vpack.c.b16 %v1942, %v1932
        %v2253 = vpack.c.b16 %v1943, %v1933
        %v2254 = vpack.c.b16 %v1944, %v1934
        %v2255 = vpack.c.b16 %v1945, %v1935
        %v2256 = vpack.c.b16 %v1956, %v1946
        %v2257 = vpack.c.b16 %v1957, %v1947
        %v2258 = vpack.c.b16 %v1958, %v1948
        %v2259 = vpack.c.b16 %v1959, %v1949
        %v2260 = vpack.c.b16 %v1960, %v1950
        %v2261 = vpack.c.b16 %v1961, %v1951
        %v2262 = vpack.c.b16 %v1962, %v1952
        %v2263 = vpack.c.b16 %v1963, %v1953
        %v2264 = vpack.c.b16 %v1964, %v1954
        %v2265 = vpack.c.b16 %v1965, %v1955
        %v2266 = vpack.c.b16 %v1976, %v1966
        %v2267 = vpack.c.b16 %v1977, %v1967
        %v2268 = vpack.c.b16 %v1978, %v1968
        %v2269 = vpack.c.b16 %v1979, %v1969
        %v2270 = vpack.c.b16 %v1980, %v1970
        %v2271 = vpack.c.b16 %v1981, %v1971
        %v2272 = vpack.c.b16 %v1982, %v1972
        %v2273 = vpack.c.b16 %v1983, %v1973
        %v2274 = vpack.c.b16 %v1984, %v1974
        %v2275 = vpack.c.b16 %v1985, %v1975
        %v2276 = vpack.c.b16 %v1996, %v1986
        %v2277 = vpack.c.b16 %v1997, %v1987
        %v2278 = vpack.c.b16 %v1998, %v1988
        %v2279 = vpack.c.b16 %v1999, %v1989
        %v2280 = vpack.c.b16 %v2000, %v1990
        %v2281 = vpack.c.b16 %v2001, %v1991
        %v2282 = vpack.c.b16 %v2002, %v1992
        %v2283 = vpack.c.b16 %v2003, %v1993
        %v2284 = vpack.c.b16 %v2004, %v1994
        %v2285 = vpack.c.b16 %v2005, %v1995
        %v2286 = vpack.c.b16 %v2016, %v2006
        %v2287 = vpack.c.b16 %v2017, %v2007
        %v2288 = vpack.c.b16 %v2018, %v2008
        %v2289 = vpack.c.b16 %v2019, %v2009
        %v2290 = vpack.c.b16 %v2020, %v2010
        %v2291 = vpack.c.b16 %v2021, %v2011
        %v2292 = vpack.c.b16 %v2022, %v2012
        %v2293 = vpack.c.b16 %v2023, %v2013
        %v2294 = vpack.c.b16 %v2024, %v2014
        %v2295 = vpack.c.b16 %v2025, %v2015
        %v2296 = vpack.c.b16 %v2036, %v2026
        %v2297 = vpack.c.b16 %v2037, %v2027
        %v2298 = vpack.c.b16 %v2038, %v2028
        %v2299 = vpack.c.b16 %v2039, %v2029
        %v2300 = vpack.c.b16 %v2040, %v2030
        %v2301 = vpack.c.b16 %v2041, %v2031
        %v2302 = vpack.c.b16 %v2042, %v2032
        %v2303 = vpack.c.b16 %v2043, %v2033
        %v2304 = vpack.c.b16 %v2044, %v2034
        %v2305 = vpack.c.b16 %v2045, %v2035
        %v2306 = vpack.c.b16 %v2056, %v2046
        %v2307 = vpack.c.b16 %v2057, %v2047
        %v2308 = vpack.c.b16 %v2058, %v2048
        %v2309 = vpack.c.b16 %v2059, %v2049
        %v2310 = vpack.c.b16 %v2060, %v2050
        %v2311 = vpack.c.b16 %v2061, %v2051
        %v2312 = vpack.c.b16 %v2062, %v2052
        %v2313 = vpack.c.b16 %v2063, %v2053
        %v2314 = vpack.c.b16 %v2064, %v2054
        %v2315 = vpack.c.b16 %v2065, %v2055
        %v2316 = vpack.c.b16 %v2076, %v2066
        %v2317 = vpack.c.b16 %v2077, %v2067
        %v2318 = vpack.c.b16 %v2078, %v2068
        %v2319 = vpack.c.b16 %v2079, %v2069
        %v2320 = vpack.c.b16 %v2080, %v2070
        %v2321 = vpack.c.b16 %v2081, %v2071
        %v2322 = vpack.c.b16 %v2082, %v2072
        %v2323 = vpack.c.b16 %v2083, %v2073
        %v2324 = vpack.c.b16 %v2084, %v2074
        %v2325 = vpack.c.b16 %v2085, %v2075
        %v2326 = vpack.c.b16 %v2096, %v2086
        %v2327 = vpack.c.b16 %v2097, %v2087
        %v2328 = vpack.c.b16 %v2098, %v2088
        %v2329 = vpack.c.b16 %v2099, %v2089
        %v2330 = vpack.c.b16 %v2100, %v2090
        %v2331 = vpack.c.b16 %v2101, %v2091
        %v2332 = vpack.c.b16 %v2102, %v2092
        %v2333 = vpack.c.b16 %v2103, %v2093
        %v2334 = vpack.c.b16 %v2104, %v2094
        %v2335 = vpack.c.b16 %v2105, %v2095
        %v2336 = vpack.c.b16 %v2116, %v2106
        %v2337 = vpack.c.b16 %v2117, %v2107
        %v2338 = vpack.c.b16 %v2118, %v2108
        %v2339 = vpack.c.b16 %v2119, %v2109
        %v2340 = vpack.c.b16 %v2120, %v2110
        %v2341 = vpack.c.b16 %v2121, %v2111
        %v2342 = vpack.c.b16 %v2122, %v2112
        %v2343 = vpack.c.b16 %v2123, %v2113
        %v2344 = vpack.c.b16 %v2124, %v2114
        %v2345 = vpack.c.b16 %v2125, %v2115
        %v2346 = vpack.c.b16 %v2136, %v2126
        %v2347 = vpack.c.b16 %v2137, %v2127
        %v2348 = vpack.c.b16 %v2138, %v2128
        %v2349 = vpack.c.b16 %v2139, %v2129
        %v2350 = vpack.c.b16 %v2140, %v2130
        %v2351 = vpack.c.b16 %v2141, %v2131
        %v2352 = vpack.c.b16 %v2142, %v2132
        %v2353 = vpack.c.b16 %v2143, %v2133
        %v2354 = vpack.c.b16 %v2144, %v2134
        %v2355 = vpack.c.b16 %v2145, %v2135
        %v2356 = vpack.c.b16 %v2156, %v2146
        %v2357 = vpack.c.b16 %v2157, %v2147
        %v2358 = vpack.c.b16 %v2158, %v2148
        %v2359 = vpack.c.b16 %v2159, %v2149
        %v2360 = vpack.c.b16 %v2160, %v2150
        %v2361 = vpack.c.b16 %v2161, %v2151
        %v2362 = vpack.c.b16 %v2162, %v2152
        %v2363 = vpack.c.b16 %v2163, %v2153
        %v2364 = vpack.c.b16 %v2164, %v2154
        %v2365 = vpack.c.b16 %v2165, %v2155
        %v2366 = vpack.c.b16 %v2176, %v2166
        %v2367 = vpack.c.b16 %v2177, %v2167
        %v2368 = vpack.c.b16 %v2178, %v2168
        %v2369 = vpack.c.b16 %v2179, %v2169
        %v2370 = vpack.c.b16 %v2180, %v2170
        %v2371 = vpack.c.b16 %v2181, %v2171
        %v2372 = vpack.c.b16 %v2182, %v2172
        %v2373 = vpack.c.b16 %v2183, %v2173
        %v2374 = vpack.c.b16 %v2184, %v2174
        %v2375 = vpack.c.b16 %v2185, %v2175
        %v2376 = vpack.c.b16 %v2196, %v2186
        %v2377 = vpack.c.b16 %v2197, %v2187
        %v2378 = vpack.c.b16 %v2198, %v2188
        %v2379 = vpack.c.b16 %v2199, %v2189
        %v2380 = vpack.c.b16 %v2200, %v2190
        %v2381 = vpack.c.b16 %v2201, %v2191
        %v2382 = vpack.c.b16 %v2202, %v2192
        %v2383 = vpack.c.b16 %v2203, %v2193
        %v2384 = vpack.c.b16 %v2204, %v2194
        %v2385 = vpack.c.b16 %v2205, %v2195
        %v2386 = vpack.c.b16 %v2216, %v2206
        %v2387 = vpack.c.b16 %v2217, %v2207
        %v2388 = vpack.c.b16 %v2218, %v2208
        %v2389 = vpack.c.b16 %v2219, %v2209
        %v2390 = vpack.c.b16 %v2220, %v2210
        %v2391 = vpack.c.b16 %v2221, %v2211
        %v2392 = vpack.c.b16 %v2222, %v2212
        %v2393 = vpack.c.b16 %v2223, %v2213
        %v2394 = vpack.c.b16 %v2224, %v2214
        %v2395 = vpack.c.b16 %v2225, %v2215
        %v2396 = vpack.c.b16 %v2236, %v2226
        %v2397 = vpack.c.b16 %v2237, %v2227
        %v2398 = vpack.c.b16 %v2238, %v2228
        %v2399 = vpack.c.b16 %v2239, %v2229
        %v2400 = vpack.c.b16 %v2240, %v2230
        %v2401 = vpack.c.b16 %v2241, %v2231
        %v2402 = vpack.c.b16 %v2242, %v2232
        %v2403 = vpack.c.b16 %v2243, %v2233
        %v2404 = vpack.c.b16 %v2244, %v2234
        %v2405 = vpack.c.b16 %v2245, %v2235
        %2566 = vmatprep.subr.bf16.mxu0 %v2247
        %2567 = vmatpush1.bf16.msra.mxu0 %v2246
        %2568 = vmatprep.subr.bf16.mxu0 %v2257
        %2569 = vmatpush1.bf16.msra.mxu0 %v2256
        %2570 = vmatprep.subr.bf16.mxu0 %v2267
        %2571 = vmatpush1.bf16.msra.mxu0 %v2266
        %2572 = vmatprep.subr.bf16.mxu0 %v2277
        %2573 = vmatpush1.bf16.msra.mxu0 %v2276
        %2574 = vmatprep.subr.bf16.mxu0 %v2287
        %2575 = vmatpush1.bf16.msra.mxu0 %v2286
        %2576 = vmatprep.subr.bf16.mxu0 %v2297
        %2577 = vmatpush1.bf16.msra.mxu0 %v2296
        %2578 = vmatprep.subr.bf16.mxu0 %v2307
        %2579 = vmatpush1.bf16.msra.mxu0 %v2306
        %2580 = vmatprep.subr.bf16.mxu0 %v2317
        %2581 = vmatpush1.bf16.msra.mxu0 %v2316
        %2582 = vmatprep.subr.bf16.mxu0 %v2327
        %2583 = vmatpush1.bf16.msra.mxu0 %v2326
        %2584 = vmatprep.subr.bf16.mxu0 %v2337
        %2585 = vmatpush1.bf16.msra.mxu0 %v2336
        %2586 = vmatprep.subr.bf16.mxu0 %v2347
        %2587 = vmatpush1.bf16.msra.mxu0 %v2346
        %2588 = vmatprep.subr.bf16.mxu0 %v2357
        %2589 = vmatpush1.bf16.msra.mxu0 %v2356
        %2590 = vmatprep.subr.bf16.mxu0 %v2367
        %2591 = vmatpush1.bf16.msra.mxu0 %v2366
        %2592 = vmatprep.subr.bf16.mxu0 %v2377
        %2593 = vmatpush1.bf16.msra.mxu0 %v2376
        %2594 = vmatprep.subr.bf16.mxu0 %v2387
        %2595 = vmatpush1.bf16.msra.mxu0 %v2386
        %2596 = vmatprep.subr.bf16.mxu0 %v2397
        %2597 = vmatpush1.bf16.msra.mxu0 %v2396
        %2598 = vmatprep.mubr.bf16.mxu0 %v1763
        %2599 = vmatmul.mubr.bf16.gmra.mrb[0].mxu0 %v1762
        %v2600 = vpop.f32.mrb[0].mxu0
        %v2601 = vadd.f32 %v1712, %v2600
        %v2602 = vpop.f32.mrb[0].mxu0
        %v2603 = vadd.f32 %v1716, %v2602
        %v2604 = vpop.f32.mrb[0].mxu0
        %v2605 = vpop.f32.mrb[0].mxu0
        %2606 = vdwg.mxu0
        %2607 = vmatprep.subr.bf16.mxu0 %v2249
        %2608 = vmatpush1.bf16.msra.mxu0 %v2248
        %2609 = vmatprep.subr.bf16.mxu0 %v2259
        %2610 = vmatpush1.bf16.msra.mxu0 %v2258
        %2611 = vmatprep.subr.bf16.mxu0 %v2269
        %2612 = vmatpush1.bf16.msra.mxu0 %v2268
        %2613 = vmatprep.subr.bf16.mxu0 %v2279
        %2614 = vmatpush1.bf16.msra.mxu0 %v2278
        %2615 = vmatprep.subr.bf16.mxu0 %v2289
        %2616 = vmatpush1.bf16.msra.mxu0 %v2288
        %2617 = vmatprep.subr.bf16.mxu0 %v2299
        %2618 = vmatpush1.bf16.msra.mxu0 %v2298
        %2619 = vmatprep.subr.bf16.mxu0 %v2309
        %2620 = vmatpush1.bf16.msra.mxu0 %v2308
        %2621 = vmatprep.subr.bf16.mxu0 %v2319
        %2622 = vmatpush1.bf16.msra.mxu0 %v2318
        %2623 = vmatprep.subr.bf16.mxu0 %v2329
        %2624 = vmatpush1.bf16.msra.mxu0 %v2328
        %2625 = vmatprep.subr.bf16.mxu0 %v2339
        %2626 = vmatpush1.bf16.msra.mxu0 %v2338
        %2627 = vmatprep.subr.bf16.mxu0 %v2349
        %2628 = vmatpush1.bf16.msra.mxu0 %v2348
        %2629 = vmatprep.subr.bf16.mxu0 %v2359
        %2630 = vmatpush1.bf16.msra.mxu0 %v2358
        %2631 = vmatprep.subr.bf16.mxu0 %v2369
        %2632 = vmatpush1.bf16.msra.mxu0 %v2368
        %2633 = vmatprep.subr.bf16.mxu0 %v2379
        %2634 = vmatpush1.bf16.msra.mxu0 %v2378
        %2635 = vmatprep.subr.bf16.mxu0 %v2389
        %2636 = vmatpush1.bf16.msra.mxu0 %v2388
        %2637 = vmatprep.subr.bf16.mxu0 %v2399
        %2638 = vmatpush1.bf16.msra.mxu0 %v2398
        %2639 = vmatprep.mubr.bf16.mxu0 %v1763
        %2640 = vmatmul.mubr.bf16.gmra.mrb[0].mxu0 %v1762
        %v2641 = vpop.f32.mrb[0].mxu0
        %v2642 = vadd.f32 %v1720, %v2641
        %v2643 = vpop.f32.mrb[0].mxu0
        %v2644 = vadd.f32 %v1724, %v2643
        %v2645 = vpop.f32.mrb[0].mxu0
        %v2646 = vpop.f32.mrb[0].mxu0
        %2647 = vdwg.mxu0
        %2648 = vmatprep.subr.bf16.mxu0 %v2251
        %2649 = vmatpush1.bf16.msra.mxu0 %v2250
        %2650 = vmatprep.subr.bf16.mxu0 %v2261
        %2651 = vmatpush1.bf16.msra.mxu0 %v2260
        %2652 = vmatprep.subr.bf16.mxu0 %v2271
        %2653 = vmatpush1.bf16.msra.mxu0 %v2270
        %2654 = vmatprep.subr.bf16.mxu0 %v2281
        %2655 = vmatpush1.bf16.msra.mxu0 %v2280
        %2656 = vmatprep.subr.bf16.mxu0 %v2291
        %2657 = vmatpush1.bf16.msra.mxu0 %v2290
        %2658 = vmatprep.subr.bf16.mxu0 %v2301
        %2659 = vmatpush1.bf16.msra.mxu0 %v2300
        %2660 = vmatprep.subr.bf16.mxu0 %v2311
        %2661 = vmatpush1.bf16.msra.mxu0 %v2310
        %2662 = vmatprep.subr.bf16.mxu0 %v2321
        %2663 = vmatpush1.bf16.msra.mxu0 %v2320
        %2664 = vmatprep.subr.bf16.mxu0 %v2331
        %2665 = vmatpush1.bf16.msra.mxu0 %v2330
        %2666 = vmatprep.subr.bf16.mxu0 %v2341
        %2667 = vmatpush1.bf16.msra.mxu0 %v2340
        %2668 = vmatprep.subr.bf16.mxu0 %v2351
        %2669 = vmatpush1.bf16.msra.mxu0 %v2350
        %2670 = vmatprep.subr.bf16.mxu0 %v2361
        %2671 = vmatpush1.bf16.msra.mxu0 %v2360
        %2672 = vmatprep.subr.bf16.mxu0 %v2371
        %2673 = vmatpush1.bf16.msra.mxu0 %v2370
        %2674 = vmatprep.subr.bf16.mxu0 %v2381
        %2675 = vmatpush1.bf16.msra.mxu0 %v2380
        %2676 = vmatprep.subr.bf16.mxu0 %v2391
        %2677 = vmatpush1.bf16.msra.mxu0 %v2390
        %2678 = vmatprep.subr.bf16.mxu0 %v2401
        %2679 = vmatpush1.bf16.msra.mxu0 %v2400
        %2680 = vmatprep.mubr.bf16.mxu0 %v1763
        %2681 = vmatmul.mubr.bf16.gmra.mrb[0].mxu0 %v1762
        %v2682 = vpop.f32.mrb[0].mxu0
        %v2683 = vadd.f32 %v1728, %v2682
        %v2684 = vpop.f32.mrb[0].mxu0
        %v2685 = vadd.f32 %v1732, %v2684
        %v2686 = vpop.f32.mrb[0].mxu0
        %v2687 = vpop.f32.mrb[0].mxu0
        %2688 = vdwg.mxu0
        %2689 = vmatprep.subr.bf16.mxu0 %v2253
        %2690 = vmatpush1.bf16.msra.mxu0 %v2252
        %2691 = vmatprep.subr.bf16.mxu0 %v2263
        %2692 = vmatpush1.bf16.msra.mxu0 %v2262
        %2693 = vmatprep.subr.bf16.mxu0 %v2273
        %2694 = vmatpush1.bf16.msra.mxu0 %v2272
        %2695 = vmatprep.subr.bf16.mxu0 %v2283
        %2696 = vmatpush1.bf16.msra.mxu0 %v2282
        %2697 = vmatprep.subr.bf16.mxu0 %v2293
        %2698 = vmatpush1.bf16.msra.mxu0 %v2292
        %2699 = vmatprep.subr.bf16.mxu0 %v2303
        %2700 = vmatpush1.bf16.msra.mxu0 %v2302
        %2701 = vmatprep.subr.bf16.mxu0 %v2313
        %2702 = vmatpush1.bf16.msra.mxu0 %v2312
        %2703 = vmatprep.subr.bf16.mxu0 %v2323
        %2704 = vmatpush1.bf16.msra.mxu0 %v2322
        %2705 = vmatprep.subr.bf16.mxu0 %v2333
        %2706 = vmatpush1.bf16.msra.mxu0 %v2332
        %2707 = vmatprep.subr.bf16.mxu0 %v2343
        %2708 = vmatpush1.bf16.msra.mxu0 %v2342
        %2709 = vmatprep.subr.bf16.mxu0 %v2353
        %2710 = vmatpush1.bf16.msra.mxu0 %v2352
        %2711 = vmatprep.subr.bf16.mxu0 %v2363
        %2712 = vmatpush1.bf16.msra.mxu0 %v2362
        %2713 = vmatprep.subr.bf16.mxu0 %v2373
        %2714 = vmatpush1.bf16.msra.mxu0 %v2372
        %2715 = vmatprep.subr.bf16.mxu0 %v2383
        %2716 = vmatpush1.bf16.msra.mxu0 %v2382
        %2717 = vmatprep.subr.bf16.mxu0 %v2393
        %2718 = vmatpush1.bf16.msra.mxu0 %v2392
        %2719 = vmatprep.subr.bf16.mxu0 %v2403
        %2720 = vmatpush1.bf16.msra.mxu0 %v2402
        %2721 = vmatprep.mubr.bf16.mxu0 %v1763
        %2722 = vmatmul.mubr.bf16.gmra.mrb[0].mxu0 %v1762
        %v2723 = vpop.f32.mrb[0].mxu0
        %v2724 = vadd.f32 %v1736, %v2723
        %v2725 = vpop.f32.mrb[0].mxu0
        %v2726 = vadd.f32 %v1740, %v2725
        %v2727 = vpop.f32.mrb[0].mxu0
        %v2728 = vpop.f32.mrb[0].mxu0
        %2729 = vdwg.mxu0
        %2730 = vmatprep.subr.bf16.mxu0 %v2255
        %2731 = vmatpush1.bf16.msra.mxu0 %v2254
        %2732 = vmatprep.subr.bf16.mxu0 %v2265
        %2733 = vmatpush1.bf16.msra.mxu0 %v2264
        %2734 = vmatprep.subr.bf16.mxu0 %v2275
        %2735 = vmatpush1.bf16.msra.mxu0 %v2274
        %2736 = vmatprep.subr.bf16.mxu0 %v2285
        %2737 = vmatpush1.bf16.msra.mxu0 %v2284
        %2738 = vmatprep.subr.bf16.mxu0 %v2295
        %2739 = vmatpush1.bf16.msra.mxu0 %v2294
        %2740 = vmatprep.subr.bf16.mxu0 %v2305
        %2741 = vmatpush1.bf16.msra.mxu0 %v2304
        %2742 = vmatprep.subr.bf16.mxu0 %v2315
        %2743 = vmatpush1.bf16.msra.mxu0 %v2314
        %2744 = vmatprep.subr.bf16.mxu0 %v2325
        %2745 = vmatpush1.bf16.msra.mxu0 %v2324
        %2746 = vmatprep.subr.bf16.mxu0 %v2335
        %2747 = vmatpush1.bf16.msra.mxu0 %v2334
        %2748 = vmatprep.subr.bf16.mxu0 %v2345
        %2749 = vmatpush1.bf16.msra.mxu0 %v2344
        %2750 = vmatprep.subr.bf16.mxu0 %v2355
        %2751 = vmatpush1.bf16.msra.mxu0 %v2354
        %2752 = vmatprep.subr.bf16.mxu0 %v2365
        %2753 = vmatpush1.bf16.msra.mxu0 %v2364
        %2754 = vmatprep.subr.bf16.mxu0 %v2375
        %2755 = vmatpush1.bf16.msra.mxu0 %v2374
        %2756 = vmatprep.subr.bf16.mxu0 %v2385
        %2757 = vmatpush1.bf16.msra.mxu0 %v2384
        %2758 = vmatprep.subr.bf16.mxu0 %v2395
        %2759 = vmatpush1.bf16.msra.mxu0 %v2394
        %2760 = vmatprep.subr.bf16.mxu0 %v2405
        %2761 = vmatpush1.bf16.msra.mxu0 %v2404
        %2762 = vmatprep.mubr.bf16.mxu0 %v1763
        %2763 = vmatmul.mubr.bf16.gmra.mrb[0].mxu0 %v1762
        %v2764 = vpop.f32.mrb[0].mxu0
        %v2765 = vadd.f32 %v1744, %v2764
        %v2766 = vpop.f32.mrb[0].mxu0
        %v2767 = vadd.f32 %v1748, %v2766
        %v2768 = vpop.f32.mrb[0].mxu0
        %v2769 = vpop.f32.mrb[0].mxu0
        %2770 = vdwg.mxu0
        %s2771 = smul.u32 %s30, 10
        %s2772 = smul.addr %s2771, 8
        %s2773 = scalar_lea.vmem [#allocation3], %s2772
        %2774 = vst [vmem:[%s2773] sm:$0xff] %v2601
        %2775 = vst [vmem:[%s2773 + $0x8] sm:$0xff] %v2603
        %2776 = vst [vmem:[%s2773 + $0x10] sm:$0xff] %v2642
        %2777 = vst [vmem:[%s2773 + $0x18] sm:$0xff] %v2644
        %2778 = vst [vmem:[%s2773 + $0x20] sm:$0xff] %v2683
        %2779 = vst [vmem:[%s2773 + $0x28] sm:$0xff] %v2685
        %2780 = vst [vmem:[%s2773 + $0x30] sm:$0xff] %v2724
        %2781 = vst [vmem:[%s2773 + $0x38] sm:$0xff] %v2726
        %2782 = vst [vmem:[%s2773 + $0x40] sm:$0xff] %v2765
        %2783 = vst [vmem:[%s2773 + $0x48] sm:$0xff] %v2767
        %v2784 = vld [vmem:[#allocation4] sm:$0xff]
        %v2785 = vmax.f32 %v2601, %v2683
        %v2786 = vmax.f32 %v2603, %v2685
        %v2787 = vmax.f32 %v2642, %v2724
        %v2788 = vmax.f32 %v2644, %v2726
        %v2789 = vmax.f32 %v2785, %v2765
        %v2790 = vmax.f32 %v2786, %v2767
        %v2791 = vmax.f32 %v2789, %v2790
        %v2792 = vmax.f32 %v2787, %v2788
        %v2793 = vmax.f32 %v2791, %v2792
        %2794 = vmax.xlane.f32.xlu0 %v2793
        %v2795 = vpop.xlane.xlu0 %2794
        %v2796 = vmax.f32 %v2784, %v2795
        %v2797 = vld [vmem:[#allocation5] sm:$0xff]
        %v2798 = vsub.f32 %v2784, %v2796
        %v2799 = vmul.f32 %v2798, 1.442695
        %v2800 = vpow.pop %v2799
        %v2801 = vmul.f32 %v2797, %v2800
        %2803 = vset.pattern.permute.xlu0 0
        %2804 = vperm.xlu0 %2803, %v2796
        %v2805 = vpop.permute.xlu0 %2804
        %v2807 = vsub.f32 %v2601, %v2805
        %v2808 = vsub.f32 %v2603, %v2805
        %v2809 = vsub.f32 %v2642, %v2805
        %v2810 = vsub.f32 %v2644, %v2805
        %v2811 = vsub.f32 %v2683, %v2805
        %v2812 = vsub.f32 %v2685, %v2805
        %v2813 = vsub.f32 %v2724, %v2805
        %v2814 = vsub.f32 %v2726, %v2805
        %v2815 = vsub.f32 %v2765, %v2805
        %v2816 = vsub.f32 %v2767, %v2805
        %v2817 = vmul.f32 %v2807, 1.442695
        %v2818 = vpow.pop %v2817
        %v2819 = vmul.f32 %v2808, 1.442695
        %v2820 = vpow.pop %v2819
        %v2821 = vmul.f32 %v2809, 1.442695
        %v2822 = vpow.pop %v2821
        %v2823 = vmul.f32 %v2810, 1.442695
        %v2824 = vpow.pop %v2823
        %v2825 = vmul.f32 %v2811, 1.442695
        %v2826 = vpow.pop %v2825
        %v2827 = vmul.f32 %v2812, 1.442695
        %v2828 = vpow.pop %v2827
        %v2829 = vmul.f32 %v2813, 1.442695
        %v2830 = vpow.pop %v2829
        %v2831 = vmul.f32 %v2814, 1.442695
        %v2832 = vpow.pop %v2831
        %v2833 = vmul.f32 %v2815, 1.442695
        %v2834 = vpow.pop %v2833
        %v2835 = vmul.f32 %v2816, 1.442695
        %v2836 = vpow.pop %v2835
        %v2837 = vadd.f32 %v2818, %v2820
        %v2838 = vadd.f32 %v2837, %v2822
        %v2839 = vadd.f32 %v2838, %v2824
        %v2840 = vadd.f32 %v2839, %v2826
        %v2841 = vadd.f32 %v2840, %v2828
        %v2842 = vadd.f32 %v2841, %v2830
        %v2843 = vadd.f32 %v2842, %v2832
        %v2844 = vadd.f32 %v2843, %v2834
        %v2845 = vadd.f32 %v2844, %v2836
        %2846 = vadd.xlane.f32.xlu0 %v2845
        %v2847 = vpop.xlane.xlu0 %2846
        %v2848 = vadd.f32 %v2801, %v2847
        %vm2849 = vcmask 7168
        %2850 = vst.msk [vmem:[#allocation5] sm:$0xff] %vm2849, %v2848
        %2851 = vst.msk [vmem:[#allocation4] sm:$0xff] %vm2849, %v2796
        %p2852 = scmp.eq.s32.totalorder %s30, 3
        // Predicated region
        $region81: #{tpu_custom_call.1} parent=47 // pred_check
          %p2853 = pneg %p2852
        $region82: #{tpu_custom_call.1} parent=47 // pred_check_branch
          %2855 = sbr.rel (%p2853) target = $region84
        $region83: #{tpu_custom_call.1} parent=47 // pred_region
          %v2856 = vld [vmem:[#allocation4] sm:$0xff]
          %v2857 = vld [vmem:[#allocation5] sm:$0xff]
          %v2858 = vrcp.pop %v2857
          %v2859 = vld [vmem:[#allocation3] sm:$0xff]
          %v2860 = vld [vmem:[#allocation3 + $0x8] sm:$0xff]
          %v2861 = vld [vmem:[#allocation3 + $0x10] sm:$0xff]
          %v2862 = vld [vmem:[#allocation3 + $0x18] sm:$0xff]
          %v2863 = vld [vmem:[#allocation3 + $0x20] sm:$0xff]
          %v2864 = vld [vmem:[#allocation3 + $0x28] sm:$0xff]
          %v2865 = vld [vmem:[#allocation3 + $0x30] sm:$0xff]
          %v2866 = vld [vmem:[#allocation3 + $0x38] sm:$0xff]
          %v2867 = vld [vmem:[#allocation3 + $0x40] sm:$0xff]
          %v2868 = vld [vmem:[#allocation3 + $0x48] sm:$0xff]
          %2870 = vset.pattern.permute.xlu0 0
          %2871 = vperm.xlu0 %2870, %v2856
          %v2872 = vpop.permute.xlu0 %2871
          %v2874 = vsub.f32 %v2859, %v2872
          %v2875 = vsub.f32 %v2860, %v2872
          %v2876 = vsub.f32 %v2861, %v2872
          %v2877 = vsub.f32 %v2862, %v2872
          %v2878 = vsub.f32 %v2863, %v2872
          %v2879 = vsub.f32 %v2864, %v2872
          %v2880 = vsub.f32 %v2865, %v2872
          %v2881 = vsub.f32 %v2866, %v2872
          %v2882 = vsub.f32 %v2867, %v2872
          %v2883 = vsub.f32 %v2868, %v2872
          %v2884 = vmul.f32 %v2874, 1.442695
          %v2885 = vpow.pop %v2884
          %v2886 = vmul.f32 %v2875, 1.442695
          %v2887 = vpow.pop %v2886
          %v2888 = vmul.f32 %v2876, 1.442695
          %v2889 = vpow.pop %v2888
          %v2890 = vmul.f32 %v2877, 1.442695
          %v2891 = vpow.pop %v2890
          %v2892 = vmul.f32 %v2878, 1.442695
          %v2893 = vpow.pop %v2892
          %v2894 = vmul.f32 %v2879, 1.442695
          %v2895 = vpow.pop %v2894
          %v2896 = vmul.f32 %v2880, 1.442695
          %v2897 = vpow.pop %v2896
          %v2898 = vmul.f32 %v2881, 1.442695
          %v2899 = vpow.pop %v2898
          %v2900 = vmul.f32 %v2882, 1.442695
          %v2901 = vpow.pop %v2900
          %v2902 = vmul.f32 %v2883, 1.442695
          %v2903 = vpow.pop %v2902
          %2905 = vset.pattern.permute.xlu0 0
          %2906 = vperm.xlu0 %2905, %v2858
          %v2907 = vpop.permute.xlu0 %2906
          %v2909 = vmul.f32 %v2885, %v2907
          %v2910 = vmul.f32 %v2887, %v2907
          %v2911 = vmul.f32 %v2889, %v2907
          %v2912 = vmul.f32 %v2891, %v2907
          %v2913 = vmul.f32 %v2893, %v2907
          %v2914 = vmul.f32 %v2895, %v2907
          %v2915 = vmul.f32 %v2897, %v2907
          %v2916 = vmul.f32 %v2899, %v2907
          %v2917 = vmul.f32 %v2901, %v2907
          %v2918 = vmul.f32 %v2903, %v2907
          %2919 = vst [vmem:[#allocation18] sm:$0xff] %v2909
          %2920 = vst [vmem:[#allocation18 + $0x8] sm:$0xff] %v2910
          %2921 = vst [vmem:[#allocation18 + $0x10] sm:$0xff] %v2911
          %2922 = vst [vmem:[#allocation18 + $0x18] sm:$0xff] %v2912
          %2923 = vst [vmem:[#allocation18 + $0x20] sm:$0xff] %v2913
          %2924 = vst [vmem:[#allocation18 + $0x28] sm:$0xff] %v2914
          %2925 = vst [vmem:[#allocation18 + $0x30] sm:$0xff] %v2915
          %2926 = vst [vmem:[#allocation18 + $0x38] sm:$0xff] %v2916
          %2927 = vst [vmem:[#allocation18 + $0x40] sm:$0xff] %v2917
          %2928 = vst [vmem:[#allocation18 + $0x48] sm:$0xff] %v2918
          %s2929 = scalar_lea.vmem [#allocation3], 80
          %v2930 = vld [vmem:[%s2929] sm:$0xff]
          %v2931 = vld [vmem:[%s2929 + $0x8] sm:$0xff]
          %v2932 = vld [vmem:[%s2929 + $0x10] sm:$0xff]
          %v2933 = vld [vmem:[%s2929 + $0x18] sm:$0xff]
          %v2934 = vld [vmem:[%s2929 + $0x20] sm:$0xff]
          %v2935 = vld [vmem:[%s2929 + $0x28] sm:$0xff]
          %v2936 = vld [vmem:[%s2929 + $0x30] sm:$0xff]
          %v2937 = vld [vmem:[%s2929 + $0x38] sm:$0xff]
          %v2938 = vld [vmem:[%s2929 + $0x40] sm:$0xff]
          %v2939 = vld [vmem:[%s2929 + $0x48] sm:$0xff]
          %v2940 = vsub.f32 %v2930, %v2872
          %v2941 = vsub.f32 %v2931, %v2872
          %v2942 = vsub.f32 %v2932, %v2872
          %v2943 = vsub.f32 %v2933, %v2872
          %v2944 = vsub.f32 %v2934, %v2872
          %v2945 = vsub.f32 %v2935, %v2872
          %v2946 = vsub.f32 %v2936, %v2872
          %v2947 = vsub.f32 %v2937, %v2872
          %v2948 = vsub.f32 %v2938, %v2872
          %v2949 = vsub.f32 %v2939, %v2872
          %v2950 = vmul.f32 %v2940, 1.442695
          %v2951 = vpow.pop %v2950
          %v2952 = vmul.f32 %v2941, 1.442695
          %v2953 = vpow.pop %v2952
          %v2954 = vmul.f32 %v2942, 1.442695
          %v2955 = vpow.pop %v2954
          %v2956 = vmul.f32 %v2943, 1.442695
          %v2957 = vpow.pop %v2956
          %v2958 = vmul.f32 %v2944, 1.442695
          %v2959 = vpow.pop %v2958
          %v2960 = vmul.f32 %v2945, 1.442695
          %v2961 = vpow.pop %v2960
          %v2962 = vmul.f32 %v2946, 1.442695
          %v2963 = vpow.pop %v2962
          %v2964 = vmul.f32 %v2947, 1.442695
          %v2965 = vpow.pop %v2964
          %v2966 = vmul.f32 %v2948, 1.442695
          %v2967 = vpow.pop %v2966
          %v2968 = vmul.f32 %v2949, 1.442695
          %v2969 = vpow.pop %v2968
          %v2970 = vmul.f32 %v2951, %v2907
          %v2971 = vmul.f32 %v2953, %v2907
          %v2972 = vmul.f32 %v2955, %v2907
          %v2973 = vmul.f32 %v2957, %v2907
          %v2974 = vmul.f32 %v2959, %v2907
          %v2975 = vmul.f32 %v2961, %v2907
          %v2976 = vmul.f32 %v2963, %v2907
          %v2977 = vmul.f32 %v2965, %v2907
          %v2978 = vmul.f32 %v2967, %v2907
          %v2979 = vmul.f32 %v2969, %v2907
          %2980 = vst [vmem:[#allocation18 + $0x50] sm:$0xff] %v2970
          %2981 = vst [vmem:[#allocation18 + $0x58] sm:$0xff] %v2971
          %2982 = vst [vmem:[#allocation18 + $0x60] sm:$0xff] %v2972
          %2983 = vst [vmem:[#allocation18 + $0x68] sm:$0xff] %v2973
          %2984 = vst [vmem:[#allocation18 + $0x70] sm:$0xff] %v2974
          %2985 = vst [vmem:[#allocation18 + $0x78] sm:$0xff] %v2975
          %2986 = vst [vmem:[#allocation18 + $0x80] sm:$0xff] %v2976
          %2987 = vst [vmem:[#allocation18 + $0x88] sm:$0xff] %v2977
          %2988 = vst [vmem:[#allocation18 + $0x90] sm:$0xff] %v2978
          %2989 = vst [vmem:[#allocation18 + $0x98] sm:$0xff] %v2979
          %s2990 = scalar_lea.vmem [#allocation3], 160
          %v2991 = vld [vmem:[%s2990] sm:$0xff]
          %v2992 = vld [vmem:[%s2990 + $0x8] sm:$0xff]
          %v2993 = vld [vmem:[%s2990 + $0x10] sm:$0xff]
          %v2994 = vld [vmem:[%s2990 + $0x18] sm:$0xff]
          %v2995 = vld [vmem:[%s2990 + $0x20] sm:$0xff]
          %v2996 = vld [vmem:[%s2990 + $0x28] sm:$0xff]
          %v2997 = vld [vmem:[%s2990 + $0x30] sm:$0xff]
          %v2998 = vld [vmem:[%s2990 + $0x38] sm:$0xff]
          %v2999 = vld [vmem:[%s2990 + $0x40] sm:$0xff]
          %v3000 = vld [vmem:[%s2990 + $0x48] sm:$0xff]
          %v3001 = vsub.f32 %v2991, %v2872
          %v3002 = vsub.f32 %v2992, %v2872
          %v3003 = vsub.f32 %v2993, %v2872
          %v3004 = vsub.f32 %v2994, %v2872
          %v3005 = vsub.f32 %v2995, %v2872
          %v3006 = vsub.f32 %v2996, %v2872
          %v3007 = vsub.f32 %v2997, %v2872
          %v3008 = vsub.f32 %v2998, %v2872
          %v3009 = vsub.f32 %v2999, %v2872
          %v3010 = vsub.f32 %v3000, %v2872
          %v3011 = vmul.f32 %v3001, 1.442695
          %v3012 = vpow.pop %v3011
          %v3013 = vmul.f32 %v3002, 1.442695
          %v3014 = vpow.pop %v3013
          %v3015 = vmul.f32 %v3003, 1.442695
          %v3016 = vpow.pop %v3015
          %v3017 = vmul.f32 %v3004, 1.442695
          %v3018 = vpow.pop %v3017
          %v3019 = vmul.f32 %v3005, 1.442695
          %v3020 = vpow.pop %v3019
          %v3021 = vmul.f32 %v3006, 1.442695
          %v3022 = vpow.pop %v3021
          %v3023 = vmul.f32 %v3007, 1.442695
          %v3024 = vpow.pop %v3023
          %v3025 = vmul.f32 %v3008, 1.442695
          %v3026 = vpow.pop %v3025
          %v3027 = vmul.f32 %v3009, 1.442695
          %v3028 = vpow.pop %v3027
          %v3029 = vmul.f32 %v3010, 1.442695
          %v3030 = vpow.pop %v3029
          %v3031 = vmul.f32 %v3012, %v2907
          %v3032 = vmul.f32 %v3014, %v2907
          %v3033 = vmul.f32 %v3016, %v2907
          %v3034 = vmul.f32 %v3018, %v2907
          %v3035 = vmul.f32 %v3020, %v2907
          %v3036 = vmul.f32 %v3022, %v2907
          %v3037 = vmul.f32 %v3024, %v2907
          %v3038 = vmul.f32 %v3026, %v2907
          %v3039 = vmul.f32 %v3028, %v2907
          %v3040 = vmul.f32 %v3030, %v2907
          %3041 = vst [vmem:[#allocation18 + $0xa0] sm:$0xff] %v3031
          %3042 = vst [vmem:[#allocation18 + $0xa8] sm:$0xff] %v3032
          %3043 = vst [vmem:[#allocation18 + $0xb0] sm:$0xff] %v3033
          %3044 = vst [vmem:[#allocation18 + $0xb8] sm:$0xff] %v3034
          %3045 = vst [vmem:[#allocation18 + $0xc0] sm:$0xff] %v3035
          %3046 = vst [vmem:[#allocation18 + $0xc8] sm:$0xff] %v3036
          %3047 = vst [vmem:[#allocation18 + $0xd0] sm:$0xff] %v3037
          %3048 = vst [vmem:[#allocation18 + $0xd8] sm:$0xff] %v3038
          %3049 = vst [vmem:[#allocation18 + $0xe0] sm:$0xff] %v3039
          %3050 = vst [vmem:[#allocation18 + $0xe8] sm:$0xff] %v3040
          %s3051 = scalar_lea.vmem [#allocation3], 240
          %v3052 = vld [vmem:[%s3051] sm:$0xff]
          %v3053 = vld [vmem:[%s3051 + $0x8] sm:$0xff]
          %v3054 = vld [vmem:[%s3051 + $0x10] sm:$0xff]
          %v3055 = vld [vmem:[%s3051 + $0x18] sm:$0xff]
          %v3056 = vld [vmem:[%s3051 + $0x20] sm:$0xff]
          %v3057 = vld [vmem:[%s3051 + $0x28] sm:$0xff]
          %v3058 = vld [vmem:[%s3051 + $0x30] sm:$0xff]
          %v3059 = vld [vmem:[%s3051 + $0x38] sm:$0xff]
          %v3060 = vld [vmem:[%s3051 + $0x40] sm:$0xff]
          %v3061 = vld [vmem:[%s3051 + $0x48] sm:$0xff]
          %v3062 = vsub.f32 %v3052, %v2872
          %v3063 = vsub.f32 %v3053, %v2872
          %v3064 = vsub.f32 %v3054, %v2872
          %v3065 = vsub.f32 %v3055, %v2872
          %v3066 = vsub.f32 %v3056, %v2872
          %v3067 = vsub.f32 %v3057, %v2872
          %v3068 = vsub.f32 %v3058, %v2872
          %v3069 = vsub.f32 %v3059, %v2872
          %v3070 = vsub.f32 %v3060, %v2872
          %v3071 = vsub.f32 %v3061, %v2872
          %v3072 = vmul.f32 %v3062, 1.442695
          %v3073 = vpow.pop %v3072
          %v3074 = vmul.f32 %v3063, 1.442695
          %v3075 = vpow.pop %v3074
          %v3076 = vmul.f32 %v3064, 1.442695
          %v3077 = vpow.pop %v3076
          %v3078 = vmul.f32 %v3065, 1.442695
          %v3079 = vpow.pop %v3078
          %v3080 = vmul.f32 %v3066, 1.442695
          %v3081 = vpow.pop %v3080
          %v3082 = vmul.f32 %v3067, 1.442695
          %v3083 = vpow.pop %v3082
          %v3084 = vmul.f32 %v3068, 1.442695
          %v3085 = vpow.pop %v3084
          %v3086 = vmul.f32 %v3069, 1.442695
          %v3087 = vpow.pop %v3086
          %v3088 = vmul.f32 %v3070, 1.442695
          %v3089 = vpow.pop %v3088
          %v3090 = vmul.f32 %v3071, 1.442695
          %v3091 = vpow.pop %v3090
          %v3092 = vmul.f32 %v3073, %v2907
          %v3093 = vmul.f32 %v3075, %v2907
          %v3094 = vmul.f32 %v3077, %v2907
          %v3095 = vmul.f32 %v3079, %v2907
          %v3096 = vmul.f32 %v3081, %v2907
          %v3097 = vmul.f32 %v3083, %v2907
          %v3098 = vmul.f32 %v3085, %v2907
          %v3099 = vmul.f32 %v3087, %v2907
          %v3100 = vmul.f32 %v3089, %v2907
          %v3101 = vmul.f32 %v3091, %v2907
          %3102 = vst [vmem:[#allocation18 + $0xf0] sm:$0xff] %v3092
          %3103 = vst [vmem:[#allocation18 + $0xf8] sm:$0xff] %v3093
          %3104 = vst [vmem:[#allocation18 + $0x100] sm:$0xff] %v3094
          %3105 = vst [vmem:[#allocation18 + $0x108] sm:$0xff] %v3095
          %3106 = vst [vmem:[#allocation18 + $0x110] sm:$0xff] %v3096
          %3107 = vst [vmem:[#allocation18 + $0x118] sm:$0xff] %v3097
          %3108 = vst [vmem:[#allocation18 + $0x120] sm:$0xff] %v3098
          %3109 = vst [vmem:[#allocation18 + $0x128] sm:$0xff] %v3099
          %3110 = vst [vmem:[#allocation18 + $0x130] sm:$0xff] %v3100
          %3111 = vst [vmem:[#allocation18 + $0x138] sm:$0xff] %v3101
        $region84: #{tpu_custom_call.1} parent=47 // pred_fallthru
          _
        // Predicated region
        $region85: #{tpu_custom_call.1} parent=47 // pred_check
          %p3112 = pneg %p217
        $region86: #{tpu_custom_call.1} parent=47 // pred_check_branch
          %3114 = sbr.rel (%p3112) target = $region88
        $region87: #{tpu_custom_call.1} parent=47 // pred_region
          %s3116 = ssub.s32 5120, 5120
          %3117 = vsyncadd [#allocation8], %s3116
          %s3118 = smul.addr %s29, 40
          %s3119 = smul.addr %s3118, 128
          %s3120 = scalar_lea.hbm %s7, %s3119
          %s3122 = sshll.u32 [#allocation18], 4
          %s3123 = int_to_ptr.vmem [resolvable:$true] %s3122
          %3125 = dma.vmem_to_hbm [thread:$0]  %s3123, 5120, %s3120, [#allocation8]
        $region88: #{tpu_custom_call.1} parent=47 // pred_fallthru
          _
        // Predicated region
        $region89: #{tpu_custom_call.1} parent=47 // pred_check
          %p3126 = pneg %p217
        $region90: #{tpu_custom_call.1} parent=47 // pred_check_branch
          %3128 = sbr.rel (%p3126) target = $region92
        $region91: #{tpu_custom_call.1} parent=47 // pred_region
          %3129 = dma.done [#allocation8], 5120
        $region92: #{tpu_custom_call.1} parent=47 // pred_fallthru
          _
      $region48: #{tpu_custom_call.1} parent=5 // pred_fallthru
        _
      %p3130 = scmp.le.s32.totalorder 2, %s20
      // Predicated region
      $region93: #{tpu_custom_call.1} parent=5 // pred_check
        %p3131 = pneg %p3130
      $region94: #{tpu_custom_call.1} parent=5 // pred_check_branch
        %3133 = sbr.rel (%p3131) target = $region96
      $region95: #{tpu_custom_call.1} parent=5 // pred_region
        %s3134 = ssub.s32 %s20, 2
      $region96: #{tpu_custom_call.1} parent=5 // pred_fallthru
        _
    $region6: #{tpu_custom_call.1} parent=1 // loop_footer
      %s24 = sadd.s32 1, %s20
    $region7: #{tpu_custom_call.1} parent=1 // loop_footer_branch
      %19 = sbr.rel target = $region3
    $region8: #{tpu_custom_call.1} parent=1 // loop_exit
      _
    %3135 = vsyncpa [#allocation7], 1
    %s3136 = scalar_lea.sflag [#allocation7], 1
    %3137 = vsyncpa %s3136, 1
    %3138 = vsyncpa [#allocation10], 1
    %3139 = vsyncpa [#allocation13], 1
    %3140 = vsyncpa [#allocation16], 1
    %s3141 = scalar_lea.sflag [#allocation16], 1
    %3142 = vsyncpa %s3141, 1
    %3143 = vsyncpa [#allocation8], 1
    %s3144 = scalar_lea.sflag [#allocation8], 1
    %3145 = vsyncpa %s3144, 1

</llo_original>
